<compile_context>
chip_gen: v5e
topology: v5e:2x2
jax: 0.10.0
libtpu: 0.0.40
codegen_flags: <defaults>
</compile_context>

<pallas_src>
import jax
import jax.numpy as jnp
import numpy as np
from jax import lax
from jax.experimental import pallas as pl
from jax.experimental.pallas import tpu as pltpu

D_MODEL = 32
N_HEAD = 4
SEQ_LEN = 16
RANKS = (4, 4)            # sum == head_dim
BLOCK_SZS = (16, 8)       # "default": seq_len // 2**i
HEAD_DIM = D_MODEL // N_HEAD
assert sum(RANKS) == HEAD_DIM
for _bdx, _r in zip(BLOCK_SZS, RANKS):
    assert SEQ_LEN % _bdx == 0 and _bdx >= _r

NEG_BIG = -1e30           # finite "-inf": exp(x - m) underflows to exactly 0 in f32


def _dot_nt(a, b):
    """a @ b.T on the MXU without materializing a transpose (contract last dims)."""
    return lax.dot_general(
        a, b,
        dimension_numbers=(((1,), (1,)), ((), ())),
        preferred_element_type=jnp.float32,
    )


# ---------------------------------------------------------------------------
# Single fused kernel: per-head QKV projection -> packed MLR attention ->
# per-head output projection. Everything lives in VMEM (< 256 KiB working set).
# ---------------------------------------------------------------------------
def _mlr_fused_kernel(x_ref, wa_ref, bqkv_ref, wpt_ref, bp_ref,
                      bias_ref, blk_ref, o_ref):
    T, H, D, C = SEQ_LEN, N_HEAD, HEAD_DIM, D_MODEL
    BT = x_ref.shape[0]                               # B*T rows
    B = BT // T

    x = x_ref[...].astype(jnp.float32)                # (B*T, C)
    wa = wa_ref[...].astype(jnp.float32)              # (3C, C)

    # --- per-head QKV projections (sublane-aligned weight row slices, no lane
    #     relayouts). Concatenating the (B*T, D) per-head results along axis 0
    #     yields the packed head-major layout: row (h*B + b)*T + t. -------------
    def pack(comp):                                   # comp: 0=q, 1=k, 2=v
        base = comp * C
        parts = [_dot_nt(x, wa[base + h * D: base + (h + 1) * D, :])
                 for h in range(H)]
        return jnp.concatenate(parts, axis=0) + bqkv_ref[comp].astype(jnp.float32)

    qp, kp, vp = pack(0), pack(1), pack(2)            # each (P, D), P = B*H*T

    # --- MLR attention scores -------------------------------------------------
    # Per rank i: scale/zero the non-rank lanes of q with a (1, D) vector and do a
    # full-width (P,D)@(D,P) MXU matmul (zeroed lanes contribute nothing) -> no
    # lane slicing. Sub-T ranks get a precomputed {0,1} block mask from VMEM.
    lane = lax.broadcasted_iota(jnp.int32, (1, D), 1)
    att = None
    off = 0
    mask_idx = 0
    for r, bdx in zip(RANKS, BLOCK_SZS):
        scale = jnp.where((lane >= off) & (lane < off + r),
                          jnp.float32(1.0 / r), jnp.float32(0.0))
        s = _dot_nt(qp * scale, kp)                   # (P, P), lane-dense
        if bdx != T:
            s = blk_ref[mask_idx] * s                 # {0,1} f32 block mask
            mask_idx += 1
        att = s if att is None else att + s
        off += r

    # Single additive {0, NEG_BIG} bias = causal AND same-(b,h)-block (precomputed).
    att = att + bias_ref[...]

    # --- softmax with deferred normalization ----------------------------------
    m = jnp.max(att, axis=-1, keepdims=True)
    e = jnp.exp(att - m)                              # masked entries -> exactly 0
    l = jnp.sum(e, axis=-1, keepdims=True)            # (P, 1)
    yp = jnp.dot(e, vp, preferred_element_type=jnp.float32)   # (P, D), un-normalized
    # Normalize the small (P, D) result, not the (P, P) probabilities.
    # (pl.reciprocal(l, approx=True) is a further EUP saving on v6e/v7x, but drifts
    #  past the 1e-5 check tolerance; exact reciprocal kept for bit fidelity.)
    yp = yp * (1.0 / l)
    # TODO(synk): on v6e/v7x the softmax tail + p@v could run in bf16 for ~2x EUP
    # throughput; kept f32 for v5e compatibility and exact-tolerance checking.

    # --- output projection (w_proj passed pre-transposed -> sublane row slices) -
    wpt = wpt_ref[...].astype(jnp.float32)            # (C, C) == w_proj.T
    acc = jnp.dot(yp[0:BT, :], wpt[0:D, :], preferred_element_type=jnp.float32)
    for h in range(1, H):
        acc = acc + jnp.dot(yp[h * BT:(h + 1) * BT, :],
                            wpt[h * D:(h + 1) * D, :],
                            preferred_element_type=jnp.float32)
    out = acc + bp_ref[...].astype(jnp.float32)       # (B*T, C), single dense store
    o_ref[...] = out.astype(o_ref.dtype)


# ---------------------------------------------------------------------------
# Wrapper: free reshapes / one-time transposes and host-side static masks only.
# One pallas_call, no grid (whole problem fits VMEM comfortably at this size).
# ---------------------------------------------------------------------------
def _build_static_masks(B):
    T, H = SEQ_LEN, N_HEAD
    P = B * H * T
    p = np.arange(P)
    same_bh = (p[:, None] // T) == (p[None, :] // T)
    causal = p[:, None] >= p[None, :]
    add_bias = np.where(same_bh & causal, 0.0, NEG_BIG).astype(np.float32)
    blk = []
    for _r, bdx in zip(RANKS, BLOCK_SZS):
        if bdx != T:   # bdx divides T and block offsets align -> same bdx-block
            blk.append(((p[:, None] // bdx) == (p[None, :] // bdx)).astype(np.float32))
    if not blk:        # dummy (never referenced by the kernel)
        blk.append(np.ones((P, P), np.float32))
    return add_bias, np.stack(blk, axis=0)


def mlr_attention_forward(x, params):
    B, T, C = x.shape
    assert T == SEQ_LEN and C == D_MODEL
    H, D = N_HEAD, HEAD_DIM
    P = B * H * T

    x2d = x.reshape(B * T, C)                          # bitcast reshape
    w_attn = params["w_attn"]                          # (3C, C), PyTorch Linear layout
    w_proj_t = params["w_proj"].T                      # one-time XLA transpose (outside kernel)
    b_proj = params["b_proj"].reshape(1, C)

    # Packed per-component qkv bias: [comp, (h*B + b)*T + t, d] = b_attn[comp*C + h*D + d]
    b3 = params["b_attn"].reshape(3, H, 1, D)
    b_qkv_packed = jnp.broadcast_to(b3, (3, H, B * T, D)).reshape(3, P, D)

    add_bias_np, blk_stack_np = _build_static_masks(B)
    add_bias = jnp.asarray(add_bias_np)
    blk_stack = jnp.asarray(blk_stack_np)

    vmem = pl.BlockSpec(memory_space=pltpu.MemorySpace.VMEM)
    out2d = pl.pallas_call(
        _mlr_fused_kernel,
        out_shape=jax.ShapeDtypeStruct((B * T, C), x.dtype),
        in_specs=[vmem] * 7,
        out_specs=vmem,
    )(x2d, w_attn, b_qkv_packed, w_proj_t, b_proj, add_bias, blk_stack)
    return out2d.reshape(B, T, C)


# ---------------------------------------------------------------------------
# Pure-JAX reference (mirrors the PyTorch forward) for a sanity check
# ---------------------------------------------------------------------------
def mlr_attention_reference(x, params):
    B, T, C = x.shape
    qkv = x @ params["w_attn"].T + params["b_attn"]
    q, k, v = jnp.split(qkv, 3, axis=-1)
    to_heads = lambda a: a.reshape(B, T, N_HEAD, HEAD_DIM).transpose(0, 2, 1, 3)
    q, k, v = to_heads(q), to_heads(k), to_heads(v)

    att = jnp.zeros((B, N_HEAD, T, T), jnp.float32)
    off = 0
    for r, bdx in zip(RANKS, BLOCK_SZS):
        qi = q[..., off:off + r]
        ki = k[..., off:off + r]
        s = jnp.einsum("bhqr,bhkr->bhqk", qi, ki) * (1.0 / r)
        row = np.arange(T)[:, None] // bdx
        col = np.arange(T)[None, :] // bdx
        att = att + jnp.where(jnp.asarray(row == col), s, 0.0)
        off += r
    causal = jnp.tril(jnp.ones((T, T), bool))
    att = jnp.where(causal, att, -jnp.inf)
    att = jax.nn.softmax(att, axis=-1)
    y = jnp.einsum("bhqk,bhkd->bhqd", att, v)
    y = y.transpose(0, 2, 1, 3).reshape(B, T, C)
    return y @ params["w_proj"].T + params["b_proj"]


if __name__ == "__main__":
    key = jax.random.PRNGKey(0)
    kx, k1, k2, k3, k4 = jax.random.split(key, 5)

    B = 2
    x = jax.random.normal(kx, (B, SEQ_LEN, D_MODEL), dtype=jnp.float32)

    params = {
        "w_attn": 0.02 * jax.random.normal(k1, (3 * D_MODEL, D_MODEL), jnp.float32),
        "b_attn": 0.01 * jax.random.normal(k2, (3 * D_MODEL,), jnp.float32),
        "w_proj": 0.02 * jax.random.normal(k3, (D_MODEL, D_MODEL), jnp.float32),
        "b_proj": 0.01 * jax.random.normal(k4, (D_MODEL,), jnp.float32),
    }

    out = mlr_attention_forward(x, params)
    out = jax.block_until_ready(out)

    ref = jax.block_until_ready(mlr_attention_reference(x, params))
    np.testing.assert_allclose(np.asarray(out), np.asarray(ref), atol=1e-5, rtol=1e-5)

    # TODO(synk): dropout (p=0.0) is an identity here; a p>0 train-mode variant would
    # need pltpu.prng_seed / prng_random_bits inside the kernel.
    print("KERNEL_OK")
</pallas_src>

<mosaic_0001>
module attributes {stable_mosaic.version = 11 : i64} {
  func.func @_mlr_fused_kernel(%arg0: memref<32x32xf32, #tpu.memory_space<vmem>>, %arg1: memref<96x32xf32, #tpu.memory_space<vmem>>, %arg2: memref<3x128x8xf32, #tpu.memory_space<vmem>>, %arg3: memref<32x32xf32, #tpu.memory_space<vmem>>, %arg4: memref<1x32xf32, #tpu.memory_space<vmem>>, %arg5: memref<128x128xf32, #tpu.memory_space<vmem>>, %arg6: memref<1x128x128xf32, #tpu.memory_space<vmem>>, %arg7: memref<32x32xf32, #tpu.memory_space<vmem>>) attributes {dimension_semantics = [], scalar_prefetch = 0 : i64, scratch_operands = 0 : i64, tpu.core_type = #tpu.core_type<tc>} {
    %c0 = arith.constant 0 : index
    %c0_0 = arith.constant 0 : index
    %0 = vector.load %arg0[%c0, %c0_0] : memref<32x32xf32, #tpu.memory_space<vmem>>, vector<32x32xf32>
    %c0_1 = arith.constant 0 : index
    %c0_2 = arith.constant 0 : index
    %1 = vector.load %arg1[%c0_1, %c0_2] : memref<96x32xf32, #tpu.memory_space<vmem>>, vector<96x32xf32>
    %2 = vector.extract_strided_slice %1 {offsets = [0, 0], sizes = [8, 32], strides = [1, 1]} : vector<96x32xf32> to vector<8x32xf32>
    %cst = arith.constant dense<0.000000e+00> : vector<32x8xf32>
    %3 = tpu.matmul %0, %2, %cst {dimension_numbers = #tpu.dot_dimension_numbers<[1], [1], [0], [0], [0, 0, 1, 0], [], []>} : vector<32x32xf32>, vector<8x32xf32>, vector<32x8xf32> -> vector<32x8xf32>
    %4 = vector.extract_strided_slice %1 {offsets = [8, 0], sizes = [8, 32], strides = [1, 1]} : vector<96x32xf32> to vector<8x32xf32>
    %cst_3 = arith.constant dense<0.000000e+00> : vector<32x8xf32>
    %5 = tpu.matmul %0, %4, %cst_3 {dimension_numbers = #tpu.dot_dimension_numbers<[1], [1], [0], [0], [0, 0, 1, 0], [], []>} : vector<32x32xf32>, vector<8x32xf32>, vector<32x8xf32> -> vector<32x8xf32>
    %6 = vector.extract_strided_slice %1 {offsets = [16, 0], sizes = [8, 32], strides = [1, 1]} : vector<96x32xf32> to vector<8x32xf32>
    %cst_4 = arith.constant dense<0.000000e+00> : vector<32x8xf32>
    %7 = tpu.matmul %0, %6, %cst_4 {dimension_numbers = #tpu.dot_dimension_numbers<[1], [1], [0], [0], [0, 0, 1, 0], [], []>} : vector<32x32xf32>, vector<8x32xf32>, vector<32x8xf32> -> vector<32x8xf32>
    %8 = vector.extract_strided_slice %1 {offsets = [24, 0], sizes = [8, 32], strides = [1, 1]} : vector<96x32xf32> to vector<8x32xf32>
    %cst_5 = arith.constant dense<0.000000e+00> : vector<32x8xf32>
    %9 = tpu.matmul %0, %8, %cst_5 {dimension_numbers = #tpu.dot_dimension_numbers<[1], [1], [0], [0], [0, 0, 1, 0], [], []>} : vector<32x32xf32>, vector<8x32xf32>, vector<32x8xf32> -> vector<32x8xf32>
    %10 = tpu.concatenate %3, %5, %7, %9 in 0 : vector<32x8xf32>, vector<32x8xf32>, vector<32x8xf32>, vector<32x8xf32> -> vector<128x8xf32>
    %c0_6 = arith.constant 0 : index
    %c0_7 = arith.constant 0 : index
    %c0_8 = arith.constant 0 : index
    %11 = vector.load %arg2[%c0_6, %c0_7, %c0_8] : memref<3x128x8xf32, #tpu.memory_space<vmem>>, vector<1x128x8xf32>
    %12 = vector.shape_cast %11 : vector<1x128x8xf32> to vector<128x8xf32>
    %13 = arith.addf %10, %12 : vector<128x8xf32>
    %14 = vector.extract_strided_slice %1 {offsets = [32, 0], sizes = [8, 32], strides = [1, 1]} : vector<96x32xf32> to vector<8x32xf32>
    %cst_9 = arith.constant dense<0.000000e+00> : vector<32x8xf32>
    %15 = tpu.matmul %0, %14, %cst_9 {dimension_numbers = #tpu.dot_dimension_numbers<[1], [1], [0], [0], [0, 0, 1, 0], [], []>} : vector<32x32xf32>, vector<8x32xf32>, vector<32x8xf32> -> vector<32x8xf32>
    %16 = vector.extract_strided_slice %1 {offsets = [40, 0], sizes = [8, 32], strides = [1, 1]} : vector<96x32xf32> to vector<8x32xf32>
    %cst_10 = arith.constant dense<0.000000e+00> : vector<32x8xf32>
    %17 = tpu.matmul %0, %16, %cst_10 {dimension_numbers = #tpu.dot_dimension_numbers<[1], [1], [0], [0], [0, 0, 1, 0], [], []>} : vector<32x32xf32>, vector<8x32xf32>, vector<32x8xf32> -> vector<32x8xf32>
    %18 = vector.extract_strided_slice %1 {offsets = [48, 0], sizes = [8, 32], strides = [1, 1]} : vector<96x32xf32> to vector<8x32xf32>
    %cst_11 = arith.constant dense<0.000000e+00> : vector<32x8xf32>
    %19 = tpu.matmul %0, %18, %cst_11 {dimension_numbers = #tpu.dot_dimension_numbers<[1], [1], [0], [0], [0, 0, 1, 0], [], []>} : vector<32x32xf32>, vector<8x32xf32>, vector<32x8xf32> -> vector<32x8xf32>
    %20 = vector.extract_strided_slice %1 {offsets = [56, 0], sizes = [8, 32], strides = [1, 1]} : vector<96x32xf32> to vector<8x32xf32>
    %cst_12 = arith.constant dense<0.000000e+00> : vector<32x8xf32>
    %21 = tpu.matmul %0, %20, %cst_12 {dimension_numbers = #tpu.dot_dimension_numbers<[1], [1], [0], [0], [0, 0, 1, 0], [], []>} : vector<32x32xf32>, vector<8x32xf32>, vector<32x8xf32> -> vector<32x8xf32>
    %22 = tpu.concatenate %15, %17, %19, %21 in 0 : vector<32x8xf32>, vector<32x8xf32>, vector<32x8xf32>, vector<32x8xf32> -> vector<128x8xf32>
    %c1 = arith.constant 1 : index
    %c0_13 = arith.constant 0 : index
    %c0_14 = arith.constant 0 : index
    %23 = vector.load %arg2[%c1, %c0_13, %c0_14] : memref<3x128x8xf32, #tpu.memory_space<vmem>>, vector<1x128x8xf32>
    %24 = vector.shape_cast %23 : vector<1x128x8xf32> to vector<128x8xf32>
    %25 = arith.addf %22, %24 : vector<128x8xf32>
    %26 = vector.extract_strided_slice %1 {offsets = [64, 0], sizes = [8, 32], strides = [1, 1]} : vector<96x32xf32> to vector<8x32xf32>
    %cst_15 = arith.constant dense<0.000000e+00> : vector<32x8xf32>
    %27 = tpu.matmul %0, %26, %cst_15 {dimension_numbers = #tpu.dot_dimension_numbers<[1], [1], [0], [0], [0, 0, 1, 0], [], []>} : vector<32x32xf32>, vector<8x32xf32>, vector<32x8xf32> -> vector<32x8xf32>
    %28 = vector.extract_strided_slice %1 {offsets = [72, 0], sizes = [8, 32], strides = [1, 1]} : vector<96x32xf32> to vector<8x32xf32>
    %cst_16 = arith.constant dense<0.000000e+00> : vector<32x8xf32>
    %29 = tpu.matmul %0, %28, %cst_16 {dimension_numbers = #tpu.dot_dimension_numbers<[1], [1], [0], [0], [0, 0, 1, 0], [], []>} : vector<32x32xf32>, vector<8x32xf32>, vector<32x8xf32> -> vector<32x8xf32>
    %30 = vector.extract_strided_slice %1 {offsets = [80, 0], sizes = [8, 32], strides = [1, 1]} : vector<96x32xf32> to vector<8x32xf32>
    %cst_17 = arith.constant dense<0.000000e+00> : vector<32x8xf32>
    %31 = tpu.matmul %0, %30, %cst_17 {dimension_numbers = #tpu.dot_dimension_numbers<[1], [1], [0], [0], [0, 0, 1, 0], [], []>} : vector<32x32xf32>, vector<8x32xf32>, vector<32x8xf32> -> vector<32x8xf32>
    %32 = vector.extract_strided_slice %1 {offsets = [88, 0], sizes = [8, 32], strides = [1, 1]} : vector<96x32xf32> to vector<8x32xf32>
    %cst_18 = arith.constant dense<0.000000e+00> : vector<32x8xf32>
    %33 = tpu.matmul %0, %32, %cst_18 {dimension_numbers = #tpu.dot_dimension_numbers<[1], [1], [0], [0], [0, 0, 1, 0], [], []>} : vector<32x32xf32>, vector<8x32xf32>, vector<32x8xf32> -> vector<32x8xf32>
    %34 = tpu.concatenate %27, %29, %31, %33 in 0 : vector<32x8xf32>, vector<32x8xf32>, vector<32x8xf32>, vector<32x8xf32> -> vector<128x8xf32>
    %c2 = arith.constant 2 : index
    %c0_19 = arith.constant 0 : index
    %c0_20 = arith.constant 0 : index
    %35 = vector.load %arg2[%c2, %c0_19, %c0_20] : memref<3x128x8xf32, #tpu.memory_space<vmem>>, vector<1x128x8xf32>
    %36 = vector.shape_cast %35 : vector<1x128x8xf32> to vector<128x8xf32>
    %37 = arith.addf %34, %36 : vector<128x8xf32>
    %38 = tpu.iota {dimensions = array<i32: 1>} : vector<1x8xi32>
    %c0_i32 = arith.constant 0 : i32
    %39 = vector.broadcast %c0_i32 : i32 to vector<1x8xi32>
    %40 = arith.cmpi sge, %38, %39 : vector<1x8xi32>
    %c4_i32 = arith.constant 4 : i32
    %41 = vector.broadcast %c4_i32 : i32 to vector<1x8xi32>
    %42 = arith.cmpi slt, %38, %41 : vector<1x8xi32>
    %43 = arith.andi %40, %42 : vector<1x8xi1>
    %cst_21 = arith.constant 2.500000e-01 : f32
    %cst_22 = arith.constant 0.000000e+00 : f32
    %44 = vector.broadcast %cst_21 : f32 to vector<1x8xf32>
    %45 = vector.broadcast %cst_22 : f32 to vector<1x8xf32>
    %46 = arith.select %43, %44, %45 : vector<1x8xi1>, vector<1x8xf32>
    %47 = vector.broadcast %46 : vector<1x8xf32> to vector<128x8xf32>
    %48 = arith.mulf %13, %47 : vector<128x8xf32>
    %cst_23 = arith.constant dense<0.000000e+00> : vector<128x128xf32>
    %49 = tpu.matmul %48, %25, %cst_23 {dimension_numbers = #tpu.dot_dimension_numbers<[1], [1], [0], [0], [0, 0, 1, 0], [], []>} : vector<128x8xf32>, vector<128x8xf32>, vector<128x128xf32> -> vector<128x128xf32>
    %c4_i32_24 = arith.constant 4 : i32
    %50 = vector.broadcast %c4_i32_24 : i32 to vector<1x8xi32>
    %51 = arith.cmpi sge, %38, %50 : vector<1x8xi32>
    %c8_i32 = arith.constant 8 : i32
    %52 = vector.broadcast %c8_i32 : i32 to vector<1x8xi32>
    %53 = arith.cmpi slt, %38, %52 : vector<1x8xi32>
    %54 = arith.andi %51, %53 : vector<1x8xi1>
    %cst_25 = arith.constant 2.500000e-01 : f32
    %cst_26 = arith.constant 0.000000e+00 : f32
    %55 = vector.broadcast %cst_25 : f32 to vector<1x8xf32>
    %56 = vector.broadcast %cst_26 : f32 to vector<1x8xf32>
    %57 = arith.select %54, %55, %56 : vector<1x8xi1>, vector<1x8xf32>
    %58 = vector.broadcast %57 : vector<1x8xf32> to vector<128x8xf32>
    %59 = arith.mulf %13, %58 : vector<128x8xf32>
    %cst_27 = arith.constant dense<0.000000e+00> : vector<128x128xf32>
    %60 = tpu.matmul %59, %25, %cst_27 {dimension_numbers = #tpu.dot_dimension_numbers<[1], [1], [0], [0], [0, 0, 1, 0], [], []>} : vector<128x8xf32>, vector<128x8xf32>, vector<128x128xf32> -> vector<128x128xf32>
    %c0_28 = arith.constant 0 : index
    %c0_29 = arith.constant 0 : index
    %c0_30 = arith.constant 0 : index
    %61 = vector.load %arg6[%c0_28, %c0_29, %c0_30] : memref<1x128x128xf32, #tpu.memory_space<vmem>>, vector<1x128x128xf32>
    %62 = vector.shape_cast %61 : vector<1x128x128xf32> to vector<128x128xf32>
    %63 = arith.mulf %62, %60 : vector<128x128xf32>
    %64 = arith.addf %49, %63 : vector<128x128xf32>
    %c0_31 = arith.constant 0 : index
    %c0_32 = arith.constant 0 : index
    %65 = vector.load %arg5[%c0_31, %c0_32] : memref<128x128xf32, #tpu.memory_space<vmem>>, vector<128x128xf32>
    %66 = arith.addf %64, %65 : vector<128x128xf32>
    %cst_33 = arith.constant dense<0xFF800000> : vector<128xf32>
    %67 = vector.multi_reduction <maximumf>, %66, %cst_33 [1] : vector<128x128xf32> to vector<128xf32>
    %68 = vector.shape_cast %67 : vector<128xf32> to vector<128x1xf32>
    %69 = vector.broadcast %68 : vector<128x1xf32> to vector<128x128xf32>
    %70 = arith.subf %66, %69 : vector<128x128xf32>
    %71 = math.exp %70 : vector<128x128xf32>
    %cst_34 = arith.constant dense<0.000000e+00> : vector<128xf32>
    %72 = vector.multi_reduction <add>, %71, %cst_34 [1] : vector<128x128xf32> to vector<128xf32>
    %73 = vector.shape_cast %72 : vector<128xf32> to vector<128x1xf32>
    %cst_35 = arith.constant dense<0.000000e+00> : vector<128x8xf32>
    %74 = tpu.matmul %71, %37, %cst_35 {dimension_numbers = #tpu.dot_dimension_numbers<[1], [0], [0], [1], [0, 0, 1, 1], [], []>} : vector<128x128xf32>, vector<128x8xf32>, vector<128x8xf32> -> vector<128x8xf32>
    %cst_36 = arith.constant 1.000000e+00 : f32
    %75 = vector.broadcast %cst_36 : f32 to vector<128x1xf32>
    %76 = arith.divf %75, %73 : vector<128x1xf32>
    %77 = vector.broadcast %76 : vector<128x1xf32> to vector<128x8xf32>
    %78 = arith.mulf %74, %77 : vector<128x8xf32>
    %c0_37 = arith.constant 0 : index
    %c0_38 = arith.constant 0 : index
    %79 = vector.load %arg3[%c0_37, %c0_38] : memref<32x32xf32, #tpu.memory_space<vmem>>, vector<32x32xf32>
    %80 = vector.extract_strided_slice %78 {offsets = [0, 0], sizes = [32, 8], strides = [1, 1]} : vector<128x8xf32> to vector<32x8xf32>
    %81 = vector.extract_strided_slice %79 {offsets = [0, 0], sizes = [8, 32], strides = [1, 1]} : vector<32x32xf32> to vector<8x32xf32>
    %cst_39 = arith.constant dense<0.000000e+00> : vector<32x32xf32>
    %82 = tpu.matmul %80, %81, %cst_39 {dimension_numbers = #tpu.dot_dimension_numbers<[1], [0], [0], [1], [0, 0, 1, 1], [], []>} : vector<32x8xf32>, vector<8x32xf32>, vector<32x32xf32> -> vector<32x32xf32>
    %83 = vector.extract_strided_slice %78 {offsets = [32, 0], sizes = [32, 8], strides = [1, 1]} : vector<128x8xf32> to vector<32x8xf32>
    %84 = vector.extract_strided_slice %79 {offsets = [8, 0], sizes = [8, 32], strides = [1, 1]} : vector<32x32xf32> to vector<8x32xf32>
    %cst_40 = arith.constant dense<0.000000e+00> : vector<32x32xf32>
    %85 = tpu.matmul %83, %84, %cst_40 {dimension_numbers = #tpu.dot_dimension_numbers<[1], [0], [0], [1], [0, 0, 1, 1], [], []>} : vector<32x8xf32>, vector<8x32xf32>, vector<32x32xf32> -> vector<32x32xf32>
    %86 = arith.addf %82, %85 : vector<32x32xf32>
    %87 = vector.extract_strided_slice %78 {offsets = [64, 0], sizes = [32, 8], strides = [1, 1]} : vector<128x8xf32> to vector<32x8xf32>
    %88 = vector.extract_strided_slice %79 {offsets = [16, 0], sizes = [8, 32], strides = [1, 1]} : vector<32x32xf32> to vector<8x32xf32>
    %cst_41 = arith.constant dense<0.000000e+00> : vector<32x32xf32>
    %89 = tpu.matmul %87, %88, %cst_41 {dimension_numbers = #tpu.dot_dimension_numbers<[1], [0], [0], [1], [0, 0, 1, 1], [], []>} : vector<32x8xf32>, vector<8x32xf32>, vector<32x32xf32> -> vector<32x32xf32>
    %90 = arith.addf %86, %89 : vector<32x32xf32>
    %91 = vector.extract_strided_slice %78 {offsets = [96, 0], sizes = [32, 8], strides = [1, 1]} : vector<128x8xf32> to vector<32x8xf32>
    %92 = vector.extract_strided_slice %79 {offsets = [24, 0], sizes = [8, 32], strides = [1, 1]} : vector<32x32xf32> to vector<8x32xf32>
    %cst_42 = arith.constant dense<0.000000e+00> : vector<32x32xf32>
    %93 = tpu.matmul %91, %92, %cst_42 {dimension_numbers = #tpu.dot_dimension_numbers<[1], [0], [0], [1], [0, 0, 1, 1], [], []>} : vector<32x8xf32>, vector<8x32xf32>, vector<32x32xf32> -> vector<32x32xf32>
    %94 = arith.addf %90, %93 : vector<32x32xf32>
    %c0_43 = arith.constant 0 : index
    %c0_44 = arith.constant 0 : index
    %95 = vector.load %arg4[%c0_43, %c0_44] : memref<1x32xf32, #tpu.memory_space<vmem>>, vector<1x32xf32>
    %96 = vector.broadcast %95 : vector<1x32xf32> to vector<32x32xf32>
    %97 = arith.addf %94, %96 : vector<32x32xf32>
    %c0_45 = arith.constant 0 : index
    %c0_46 = arith.constant 0 : index
    %98 = vector.load %arg7[%c0_45, %c0_46] : memref<32x32xf32, #tpu.memory_space<vmem>>, vector<32x32xf32>
    tpu.vector_store %arg7[%c0_45, %c0_46], %97 {strides = array<i32>} : memref<32x32xf32, #tpu.memory_space<vmem>>, vector<32x32xf32>,
    return
  }
}

</mosaic_0001>

<llo_original>
// kernel: tpu_custom_call.1
$region0: #{tpu_custom_call.1}
  #allocation0 [shape = 'u32[]', space=smem, size = 0x4, offset = 0x4, fixed_abs, tag = 'smem constant byte address 0x4 - core index']
  #allocation1 [shape = 'u32[72,128]{1,0:T(1,128)}', space=vmem, size = 0x9000, scoped, tag = 'internal scratch']
  %s0 = inlined_call_operand.vmem [shape: f32[32,32], index: 0, kind: input, shape index: {}]
  %s1 = inlined_call_operand.vmem [shape: f32[96,32], index: 1, kind: input, shape index: {}]
  %s2 = inlined_call_operand.vmem [shape: f32[3,128,8], index: 2, kind: input, shape index: {}]
  %s3 = inlined_call_operand.vmem [shape: f32[32,32], index: 3, kind: input, shape index: {}]
  %s4 = inlined_call_operand.vmem [shape: f32[1,32], index: 4, kind: input, shape index: {}]
  %s5 = inlined_call_operand.vmem [shape: f32[128,128], index: 5, kind: input, shape index: {}]
  %s6 = inlined_call_operand.vmem [shape: f32[1,128,128], index: 6, kind: input, shape index: {}]
  %s7 = inlined_call_operand.hbm [shape: f32[32,32], index: 7, kind: output, shape index: {}]
  %s8 = sld [smem:[#allocation0]]
  $region38: #{tpu_custom_call.1} parent=0
    _
  %s10 = ssub.s32 1, %s8
  %s11 = scalar_select 0, %s10, %s8
  $region1: #{tpu_custom_call.1} parent=0
    #allocation2 [shape = 'u8[16384]{0}', space=vmem, size = 0x4000, scoped, tag = 'output window, operand 0, single buffered']
    #allocation3 [shape = 's32[1]{0}', space=sflag, size = 0x4, scoped, tag = 'scoped memory for tpu_custom_call.1']
    %12 = vsyncpa [#allocation3], 0
    // Predicated region
    $region2: #{tpu_custom_call.1} parent=1 // pred_check
      _
    $region3: #{tpu_custom_call.1} parent=1 // pred_check_branch
      %14 = sbr.rel (0) target = $region5
    $region4: #{tpu_custom_call.1} parent=1 // pred_region
      _
    $region5: #{tpu_custom_call.1} parent=1 // pred_fallthru
      _
    // Predicated region
    $region6: #{tpu_custom_call.1} parent=1 // pred_check
      _
    $region7: #{tpu_custom_call.1} parent=1 // pred_check_branch
      %16 = sbr.rel (0) target = $region9
    $region8: #{tpu_custom_call.1} parent=1 // pred_region
      _
    $region9: #{tpu_custom_call.1} parent=1 // pred_fallthru
      _
    // Predicated region
    $region10: #{tpu_custom_call.1} parent=1 // pred_check
      _
    $region11: #{tpu_custom_call.1} parent=1 // pred_check_branch
      %18 = sbr.rel (0) target = $region13
    $region12: #{tpu_custom_call.1} parent=1 // pred_region
      _
    $region13: #{tpu_custom_call.1} parent=1 // pred_fallthru
      _
    // Predicated region
    $region14: #{tpu_custom_call.1} parent=1 // pred_check
      _
    $region15: #{tpu_custom_call.1} parent=1 // pred_check_branch
      %20 = sbr.rel (0) target = $region17
    $region16: #{tpu_custom_call.1} parent=1 // pred_region
      _
    $region17: #{tpu_custom_call.1} parent=1 // pred_fallthru
      _
    // Predicated region
    $region18: #{tpu_custom_call.1} parent=1 // pred_check
      _
    $region19: #{tpu_custom_call.1} parent=1 // pred_check_branch
      %22 = sbr.rel (0) target = $region21
    $region20: #{tpu_custom_call.1} parent=1 // pred_region
      _
    $region21: #{tpu_custom_call.1} parent=1 // pred_fallthru
      _
    // Predicated region
    $region22: #{tpu_custom_call.1} parent=1 // pred_check
      _
    $region23: #{tpu_custom_call.1} parent=1 // pred_check_branch
      %24 = sbr.rel (0) target = $region25
    $region24: #{tpu_custom_call.1} parent=1 // pred_region
      _
    $region25: #{tpu_custom_call.1} parent=1 // pred_fallthru
      _
    // Predicated region
    $region26: #{tpu_custom_call.1} parent=1 // pred_check
      _
    $region27: #{tpu_custom_call.1} parent=1 // pred_check_branch
      %26 = sbr.rel (0) target = $region29
    $region28: #{tpu_custom_call.1} parent=1 // pred_region
      _
    $region29: #{tpu_custom_call.1} parent=1 // pred_fallthru
      _
    %v27 = vld [vmem:[%s0] sm:$0xff]
    %v28 = vld [vmem:[%s0 + $0x8] sm:$0xff]
    %v29 = vld [vmem:[%s0 + $0x10] sm:$0xff]
    %v30 = vld [vmem:[%s0 + $0x18] sm:$0xff]
    %v31 = vld [vmem:[%s1] sm:$0xff]
    %v32 = vld [vmem:[%s1 + $0x8] sm:$0xff]
    %v33 = vld [vmem:[%s1 + $0x10] sm:$0xff]
    %v34 = vld [vmem:[%s1 + $0x18] sm:$0xff]
    %v35 = vld [vmem:[%s1 + $0x20] sm:$0xff]
    %v36 = vld [vmem:[%s1 + $0x28] sm:$0xff]
    %v37 = vld [vmem:[%s1 + $0x30] sm:$0xff]
    %v38 = vld [vmem:[%s1 + $0x38] sm:$0xff]
    %v39 = vld [vmem:[%s1 + $0x40] sm:$0xff]
    %v40 = vld [vmem:[%s1 + $0x48] sm:$0xff]
    %v41 = vld [vmem:[%s1 + $0x50] sm:$0xff]
    %v42 = vld [vmem:[%s1 + $0x58] sm:$0xff]
    %vm43 = vcmask 261120
    %v45 = vsel %vm43, %v27, 0
    %v48 = vsel %vm43, %v28, 0
    %v51 = vsel %vm43, %v29, 0
    %v54 = vsel %vm43, %v30, 0
    %v57 = vsel %vm43, %v31, 0
    %59 = vmatpush.xpose.msra.mxu0 0.0
    %60 = vmatpush.xpose.msra.mxu0 0.0
    %61 = vmatpush.xpose.msra.mxu0 0.0
    %62 = vmatpush.xpose.msra.mxu0 0.0
    %63 = vmatpush.xpose.msra.mxu0 0.0
    %64 = vmatpush.xpose.msra.mxu0 0.0
    %65 = vmatpush.xpose.msra.mxu0 0.0
    %66 = vmatpush.xpose.msra.mxu0 0.0
    %67 = vmatpush.xpose.msra.mxu0 0.0
    %68 = vmatpush.xpose.msra.mxu0 0.0
    %69 = vmatpush.xpose.msra.mxu0 0.0
    %70 = vmatpush.xpose.msra.mxu0 0.0
    %71 = vmatpush.xpose.msra.mxu0 0.0
    %72 = vmatpush.xpose.msra.mxu0 0.0
    %73 = vmatpush.xpose.msra.mxu0 0.0
    %74 = vmatpush.xpose.msra.mxu0 %v57
    %75 = vmatmul.f32.gmra.mxu0 %v45
    %v76 = vpop.f32.mrf.mxu0
    %v77 = vadd.f32 0.0, %v76
    %78 = vmatmul.f32.gmra.mxu0 %v48
    %v79 = vpop.f32.mrf.mxu0
    %v80 = vadd.f32 0.0, %v79
    %81 = vmatmul.f32.gmra.mxu0 %v51
    %v82 = vpop.f32.mrf.mxu0
    %v83 = vadd.f32 0.0, %v82
    %84 = vmatmul.f32.gmra.mxu0 %v54
    %v85 = vpop.f32.mrf.mxu0
    %v86 = vadd.f32 0.0, %v85
    %87 = vdwg.mxu0
    %v89 = vsel %vm43, %v32, 0
    %91 = vmatpush.xpose.msra.mxu0 0.0
    %92 = vmatpush.xpose.msra.mxu0 0.0
    %93 = vmatpush.xpose.msra.mxu0 0.0
    %94 = vmatpush.xpose.msra.mxu0 0.0
    %95 = vmatpush.xpose.msra.mxu0 0.0
    %96 = vmatpush.xpose.msra.mxu0 0.0
    %97 = vmatpush.xpose.msra.mxu0 0.0
    %98 = vmatpush.xpose.msra.mxu0 0.0
    %99 = vmatpush.xpose.msra.mxu0 0.0
    %100 = vmatpush.xpose.msra.mxu0 0.0
    %101 = vmatpush.xpose.msra.mxu0 0.0
    %102 = vmatpush.xpose.msra.mxu0 0.0
    %103 = vmatpush.xpose.msra.mxu0 0.0
    %104 = vmatpush.xpose.msra.mxu0 0.0
    %105 = vmatpush.xpose.msra.mxu0 0.0
    %106 = vmatpush.xpose.msra.mxu0 %v89
    %107 = vmatmul.f32.gmra.mxu0 %v45
    %v108 = vpop.f32.mrf.mxu0
    %v109 = vadd.f32 0.0, %v108
    %110 = vmatmul.f32.gmra.mxu0 %v48
    %v111 = vpop.f32.mrf.mxu0
    %v112 = vadd.f32 0.0, %v111
    %113 = vmatmul.f32.gmra.mxu0 %v51
    %v114 = vpop.f32.mrf.mxu0
    %v115 = vadd.f32 0.0, %v114
    %116 = vmatmul.f32.gmra.mxu0 %v54
    %v117 = vpop.f32.mrf.mxu0
    %v118 = vadd.f32 0.0, %v117
    %119 = vdwg.mxu0
    %v121 = vsel %vm43, %v33, 0
    %123 = vmatpush.xpose.msra.mxu0 0.0
    %124 = vmatpush.xpose.msra.mxu0 0.0
    %125 = vmatpush.xpose.msra.mxu0 0.0
    %126 = vmatpush.xpose.msra.mxu0 0.0
    %127 = vmatpush.xpose.msra.mxu0 0.0
    %128 = vmatpush.xpose.msra.mxu0 0.0
    %129 = vmatpush.xpose.msra.mxu0 0.0
    %130 = vmatpush.xpose.msra.mxu0 0.0
    %131 = vmatpush.xpose.msra.mxu0 0.0
    %132 = vmatpush.xpose.msra.mxu0 0.0
    %133 = vmatpush.xpose.msra.mxu0 0.0
    %134 = vmatpush.xpose.msra.mxu0 0.0
    %135 = vmatpush.xpose.msra.mxu0 0.0
    %136 = vmatpush.xpose.msra.mxu0 0.0
    %137 = vmatpush.xpose.msra.mxu0 0.0
    %138 = vmatpush.xpose.msra.mxu0 %v121
    %139 = vmatmul.f32.gmra.mxu0 %v45
    %v140 = vpop.f32.mrf.mxu0
    %v141 = vadd.f32 0.0, %v140
    %142 = vmatmul.f32.gmra.mxu0 %v48
    %v143 = vpop.f32.mrf.mxu0
    %v144 = vadd.f32 0.0, %v143
    %145 = vmatmul.f32.gmra.mxu0 %v51
    %v146 = vpop.f32.mrf.mxu0
    %v147 = vadd.f32 0.0, %v146
    %148 = vmatmul.f32.gmra.mxu0 %v54
    %v149 = vpop.f32.mrf.mxu0
    %v150 = vadd.f32 0.0, %v149
    %151 = vdwg.mxu0
    %v153 = vsel %vm43, %v34, 0
    %155 = vmatpush.xpose.msra.mxu0 0.0
    %156 = vmatpush.xpose.msra.mxu0 0.0
    %157 = vmatpush.xpose.msra.mxu0 0.0
    %158 = vmatpush.xpose.msra.mxu0 0.0
    %159 = vmatpush.xpose.msra.mxu0 0.0
    %160 = vmatpush.xpose.msra.mxu0 0.0
    %161 = vmatpush.xpose.msra.mxu0 0.0
    %162 = vmatpush.xpose.msra.mxu0 0.0
    %163 = vmatpush.xpose.msra.mxu0 0.0
    %164 = vmatpush.xpose.msra.mxu0 0.0
    %165 = vmatpush.xpose.msra.mxu0 0.0
    %166 = vmatpush.xpose.msra.mxu0 0.0
    %167 = vmatpush.xpose.msra.mxu0 0.0
    %168 = vmatpush.xpose.msra.mxu0 0.0
    %169 = vmatpush.xpose.msra.mxu0 0.0
    %170 = vmatpush.xpose.msra.mxu0 %v153
    %171 = vmatmul.f32.gmra.mxu0 %v45
    %v172 = vpop.f32.mrf.mxu0
    %v173 = vadd.f32 0.0, %v172
    %174 = vmatmul.f32.gmra.mxu0 %v48
    %v175 = vpop.f32.mrf.mxu0
    %v176 = vadd.f32 0.0, %v175
    %177 = vmatmul.f32.gmra.mxu0 %v51
    %v178 = vpop.f32.mrf.mxu0
    %v179 = vadd.f32 0.0, %v178
    %180 = vmatmul.f32.gmra.mxu0 %v54
    %v181 = vpop.f32.mrf.mxu0
    %v182 = vadd.f32 0.0, %v181
    %183 = vdwg.mxu0
    %v184 = vld [vmem:[%s2] sm:$0xff]
    %v185 = vld [vmem:[%s2 + $0x8] sm:$0xff]
    %v186 = vld [vmem:[%s2 + $0x10] sm:$0xff]
    %v187 = vld [vmem:[%s2 + $0x18] sm:$0xff]
    %v188 = vld [vmem:[%s2 + $0x20] sm:$0xff]
    %v189 = vld [vmem:[%s2 + $0x28] sm:$0xff]
    %v190 = vld [vmem:[%s2 + $0x30] sm:$0xff]
    %v191 = vld [vmem:[%s2 + $0x38] sm:$0xff]
    %v192 = vld [vmem:[%s2 + $0x40] sm:$0xff]
    %v193 = vld [vmem:[%s2 + $0x48] sm:$0xff]
    %v194 = vld [vmem:[%s2 + $0x50] sm:$0xff]
    %v195 = vld [vmem:[%s2 + $0x58] sm:$0xff]
    %v196 = vld [vmem:[%s2 + $0x60] sm:$0xff]
    %v197 = vld [vmem:[%s2 + $0x68] sm:$0xff]
    %v198 = vld [vmem:[%s2 + $0x70] sm:$0xff]
    %v199 = vld [vmem:[%s2 + $0x78] sm:$0xff]
    %v200 = vadd.f32 %v77, %v184
    %v201 = vadd.f32 %v80, %v185
    %v202 = vadd.f32 %v83, %v186
    %v203 = vadd.f32 %v86, %v187
    %v204 = vadd.f32 %v109, %v188
    %v205 = vadd.f32 %v112, %v189
    %v206 = vadd.f32 %v115, %v190
    %v207 = vadd.f32 %v118, %v191
    %v208 = vadd.f32 %v141, %v192
    %v209 = vadd.f32 %v144, %v193
    %v210 = vadd.f32 %v147, %v194
    %v211 = vadd.f32 %v150, %v195
    %v212 = vadd.f32 %v173, %v196
    %v213 = vadd.f32 %v176, %v197
    %v214 = vadd.f32 %v179, %v198
    %v215 = vadd.f32 %v182, %v199
    %v217 = vsel %vm43, %v35, 0
    %219 = vmatpush.xpose.msra.mxu0 0.0
    %220 = vmatpush.xpose.msra.mxu0 0.0
    %221 = vmatpush.xpose.msra.mxu0 0.0
    %222 = vmatpush.xpose.msra.mxu0 0.0
    %223 = vmatpush.xpose.msra.mxu0 0.0
    %224 = vmatpush.xpose.msra.mxu0 0.0
    %225 = vmatpush.xpose.msra.mxu0 0.0
    %226 = vmatpush.xpose.msra.mxu0 0.0
    %227 = vmatpush.xpose.msra.mxu0 0.0
    %228 = vmatpush.xpose.msra.mxu0 0.0
    %229 = vmatpush.xpose.msra.mxu0 0.0
    %230 = vmatpush.xpose.msra.mxu0 0.0
    %231 = vmatpush.xpose.msra.mxu0 0.0
    %232 = vmatpush.xpose.msra.mxu0 0.0
    %233 = vmatpush.xpose.msra.mxu0 0.0
    %234 = vmatpush.xpose.msra.mxu0 %v217
    %235 = vmatmul.f32.gmra.mxu0 %v45
    %v236 = vpop.f32.mrf.mxu0
    %v237 = vadd.f32 0.0, %v236
    %238 = vmatmul.f32.gmra.mxu0 %v48
    %v239 = vpop.f32.mrf.mxu0
    %v240 = vadd.f32 0.0, %v239
    %241 = vmatmul.f32.gmra.mxu0 %v51
    %v242 = vpop.f32.mrf.mxu0
    %v243 = vadd.f32 0.0, %v242
    %244 = vmatmul.f32.gmra.mxu0 %v54
    %v245 = vpop.f32.mrf.mxu0
    %v246 = vadd.f32 0.0, %v245
    %247 = vdwg.mxu0
    %v249 = vsel %vm43, %v36, 0
    %251 = vmatpush.xpose.msra.mxu0 0.0
    %252 = vmatpush.xpose.msra.mxu0 0.0
    %253 = vmatpush.xpose.msra.mxu0 0.0
    %254 = vmatpush.xpose.msra.mxu0 0.0
    %255 = vmatpush.xpose.msra.mxu0 0.0
    %256 = vmatpush.xpose.msra.mxu0 0.0
    %257 = vmatpush.xpose.msra.mxu0 0.0
    %258 = vmatpush.xpose.msra.mxu0 0.0
    %259 = vmatpush.xpose.msra.mxu0 0.0
    %260 = vmatpush.xpose.msra.mxu0 0.0
    %261 = vmatpush.xpose.msra.mxu0 0.0
    %262 = vmatpush.xpose.msra.mxu0 0.0
    %263 = vmatpush.xpose.msra.mxu0 0.0
    %264 = vmatpush.xpose.msra.mxu0 0.0
    %265 = vmatpush.xpose.msra.mxu0 0.0
    %266 = vmatpush.xpose.msra.mxu0 %v249
    %267 = vmatmul.f32.gmra.mxu0 %v45
    %v268 = vpop.f32.mrf.mxu0
    %v269 = vadd.f32 0.0, %v268
    %270 = vmatmul.f32.gmra.mxu0 %v48
    %v271 = vpop.f32.mrf.mxu0
    %v272 = vadd.f32 0.0, %v271
    %273 = vmatmul.f32.gmra.mxu0 %v51
    %v274 = vpop.f32.mrf.mxu0
    %v275 = vadd.f32 0.0, %v274
    %276 = vmatmul.f32.gmra.mxu0 %v54
    %v277 = vpop.f32.mrf.mxu0
    %v278 = vadd.f32 0.0, %v277
    %279 = vdwg.mxu0
    %v281 = vsel %vm43, %v37, 0
    %283 = vmatpush.xpose.msra.mxu0 0.0
    %284 = vmatpush.xpose.msra.mxu0 0.0
    %285 = vmatpush.xpose.msra.mxu0 0.0
    %286 = vmatpush.xpose.msra.mxu0 0.0
    %287 = vmatpush.xpose.msra.mxu0 0.0
    %288 = vmatpush.xpose.msra.mxu0 0.0
    %289 = vmatpush.xpose.msra.mxu0 0.0
    %290 = vmatpush.xpose.msra.mxu0 0.0
    %291 = vmatpush.xpose.msra.mxu0 0.0
    %292 = vmatpush.xpose.msra.mxu0 0.0
    %293 = vmatpush.xpose.msra.mxu0 0.0
    %294 = vmatpush.xpose.msra.mxu0 0.0
    %295 = vmatpush.xpose.msra.mxu0 0.0
    %296 = vmatpush.xpose.msra.mxu0 0.0
    %297 = vmatpush.xpose.msra.mxu0 0.0
    %298 = vmatpush.xpose.msra.mxu0 %v281
    %299 = vmatmul.f32.gmra.mxu0 %v45
    %v300 = vpop.f32.mrf.mxu0
    %v301 = vadd.f32 0.0, %v300
    %302 = vmatmul.f32.gmra.mxu0 %v48
    %v303 = vpop.f32.mrf.mxu0
    %v304 = vadd.f32 0.0, %v303
    %305 = vmatmul.f32.gmra.mxu0 %v51
    %v306 = vpop.f32.mrf.mxu0
    %v307 = vadd.f32 0.0, %v306
    %308 = vmatmul.f32.gmra.mxu0 %v54
    %v309 = vpop.f32.mrf.mxu0
    %v310 = vadd.f32 0.0, %v309
    %311 = vdwg.mxu0
    %v313 = vsel %vm43, %v38, 0
    %315 = vmatpush.xpose.msra.mxu0 0.0
    %316 = vmatpush.xpose.msra.mxu0 0.0
    %317 = vmatpush.xpose.msra.mxu0 0.0
    %318 = vmatpush.xpose.msra.mxu0 0.0
    %319 = vmatpush.xpose.msra.mxu0 0.0
    %320 = vmatpush.xpose.msra.mxu0 0.0
    %321 = vmatpush.xpose.msra.mxu0 0.0
    %322 = vmatpush.xpose.msra.mxu0 0.0
    %323 = vmatpush.xpose.msra.mxu0 0.0
    %324 = vmatpush.xpose.msra.mxu0 0.0
    %325 = vmatpush.xpose.msra.mxu0 0.0
    %326 = vmatpush.xpose.msra.mxu0 0.0
    %327 = vmatpush.xpose.msra.mxu0 0.0
    %328 = vmatpush.xpose.msra.mxu0 0.0
    %329 = vmatpush.xpose.msra.mxu0 0.0
    %330 = vmatpush.xpose.msra.mxu0 %v313
    %331 = vmatmul.f32.gmra.mxu0 %v45
    %v332 = vpop.f32.mrf.mxu0
    %v333 = vadd.f32 0.0, %v332
    %334 = vmatmul.f32.gmra.mxu0 %v48
    %v335 = vpop.f32.mrf.mxu0
    %v336 = vadd.f32 0.0, %v335
    %337 = vmatmul.f32.gmra.mxu0 %v51
    %v338 = vpop.f32.mrf.mxu0
    %v339 = vadd.f32 0.0, %v338
    %340 = vmatmul.f32.gmra.mxu0 %v54
    %v341 = vpop.f32.mrf.mxu0
    %v342 = vadd.f32 0.0, %v341
    %343 = vdwg.mxu0
    %s344 = scalar_lea.vmem %s2, 128
    %v345 = vld [vmem:[%s344] sm:$0xff]
    %v346 = vld [vmem:[%s344 + $0x8] sm:$0xff]
    %v347 = vld [vmem:[%s344 + $0x10] sm:$0xff]
    %v348 = vld [vmem:[%s344 + $0x18] sm:$0xff]
    %v349 = vld [vmem:[%s344 + $0x20] sm:$0xff]
    %v350 = vld [vmem:[%s344 + $0x28] sm:$0xff]
    %v351 = vld [vmem:[%s344 + $0x30] sm:$0xff]
    %v352 = vld [vmem:[%s344 + $0x38] sm:$0xff]
    %v353 = vld [vmem:[%s344 + $0x40] sm:$0xff]
    %v354 = vld [vmem:[%s344 + $0x48] sm:$0xff]
    %v355 = vld [vmem:[%s344 + $0x50] sm:$0xff]
    %v356 = vld [vmem:[%s344 + $0x58] sm:$0xff]
    %v357 = vld [vmem:[%s344 + $0x60] sm:$0xff]
    %v358 = vld [vmem:[%s344 + $0x68] sm:$0xff]
    %v359 = vld [vmem:[%s344 + $0x70] sm:$0xff]
    %v360 = vld [vmem:[%s344 + $0x78] sm:$0xff]
    %v361 = vadd.f32 %v237, %v345
    %v362 = vadd.f32 %v240, %v346
    %v363 = vadd.f32 %v243, %v347
    %v364 = vadd.f32 %v246, %v348
    %v365 = vadd.f32 %v269, %v349
    %v366 = vadd.f32 %v272, %v350
    %v367 = vadd.f32 %v275, %v351
    %v368 = vadd.f32 %v278, %v352
    %v369 = vadd.f32 %v301, %v353
    %v370 = vadd.f32 %v304, %v354
    %v371 = vadd.f32 %v307, %v355
    %v372 = vadd.f32 %v310, %v356
    %v373 = vadd.f32 %v333, %v357
    %v374 = vadd.f32 %v336, %v358
    %v375 = vadd.f32 %v339, %v359
    %v376 = vadd.f32 %v342, %v360
    %v378 = vsel %vm43, %v39, 0
    %380 = vmatpush.xpose.msra.mxu0 0.0
    %381 = vmatpush.xpose.msra.mxu0 0.0
    %382 = vmatpush.xpose.msra.mxu0 0.0
    %383 = vmatpush.xpose.msra.mxu0 0.0
    %384 = vmatpush.xpose.msra.mxu0 0.0
    %385 = vmatpush.xpose.msra.mxu0 0.0
    %386 = vmatpush.xpose.msra.mxu0 0.0
    %387 = vmatpush.xpose.msra.mxu0 0.0
    %388 = vmatpush.xpose.msra.mxu0 0.0
    %389 = vmatpush.xpose.msra.mxu0 0.0
    %390 = vmatpush.xpose.msra.mxu0 0.0
    %391 = vmatpush.xpose.msra.mxu0 0.0
    %392 = vmatpush.xpose.msra.mxu0 0.0
    %393 = vmatpush.xpose.msra.mxu0 0.0
    %394 = vmatpush.xpose.msra.mxu0 0.0
    %395 = vmatpush.xpose.msra.mxu0 %v378
    %396 = vmatmul.f32.gmra.mxu0 %v45
    %v397 = vpop.f32.mrf.mxu0
    %v398 = vadd.f32 0.0, %v397
    %399 = vmatmul.f32.gmra.mxu0 %v48
    %v400 = vpop.f32.mrf.mxu0
    %v401 = vadd.f32 0.0, %v400
    %402 = vmatmul.f32.gmra.mxu0 %v51
    %v403 = vpop.f32.mrf.mxu0
    %v404 = vadd.f32 0.0, %v403
    %405 = vmatmul.f32.gmra.mxu0 %v54
    %v406 = vpop.f32.mrf.mxu0
    %v407 = vadd.f32 0.0, %v406
    %408 = vdwg.mxu0
    %v410 = vsel %vm43, %v40, 0
    %412 = vmatpush.xpose.msra.mxu0 0.0
    %413 = vmatpush.xpose.msra.mxu0 0.0
    %414 = vmatpush.xpose.msra.mxu0 0.0
    %415 = vmatpush.xpose.msra.mxu0 0.0
    %416 = vmatpush.xpose.msra.mxu0 0.0
    %417 = vmatpush.xpose.msra.mxu0 0.0
    %418 = vmatpush.xpose.msra.mxu0 0.0
    %419 = vmatpush.xpose.msra.mxu0 0.0
    %420 = vmatpush.xpose.msra.mxu0 0.0
    %421 = vmatpush.xpose.msra.mxu0 0.0
    %422 = vmatpush.xpose.msra.mxu0 0.0
    %423 = vmatpush.xpose.msra.mxu0 0.0
    %424 = vmatpush.xpose.msra.mxu0 0.0
    %425 = vmatpush.xpose.msra.mxu0 0.0
    %426 = vmatpush.xpose.msra.mxu0 0.0
    %427 = vmatpush.xpose.msra.mxu0 %v410
    %428 = vmatmul.f32.gmra.mxu0 %v45
    %v429 = vpop.f32.mrf.mxu0
    %v430 = vadd.f32 0.0, %v429
    %431 = vmatmul.f32.gmra.mxu0 %v48
    %v432 = vpop.f32.mrf.mxu0
    %v433 = vadd.f32 0.0, %v432
    %434 = vmatmul.f32.gmra.mxu0 %v51
    %v435 = vpop.f32.mrf.mxu0
    %v436 = vadd.f32 0.0, %v435
    %437 = vmatmul.f32.gmra.mxu0 %v54
    %v438 = vpop.f32.mrf.mxu0
    %v439 = vadd.f32 0.0, %v438
    %440 = vdwg.mxu0
    %v442 = vsel %vm43, %v41, 0
    %444 = vmatpush.xpose.msra.mxu0 0.0
    %445 = vmatpush.xpose.msra.mxu0 0.0
    %446 = vmatpush.xpose.msra.mxu0 0.0
    %447 = vmatpush.xpose.msra.mxu0 0.0
    %448 = vmatpush.xpose.msra.mxu0 0.0
    %449 = vmatpush.xpose.msra.mxu0 0.0
    %450 = vmatpush.xpose.msra.mxu0 0.0
    %451 = vmatpush.xpose.msra.mxu0 0.0
    %452 = vmatpush.xpose.msra.mxu0 0.0
    %453 = vmatpush.xpose.msra.mxu0 0.0
    %454 = vmatpush.xpose.msra.mxu0 0.0
    %455 = vmatpush.xpose.msra.mxu0 0.0
    %456 = vmatpush.xpose.msra.mxu0 0.0
    %457 = vmatpush.xpose.msra.mxu0 0.0
    %458 = vmatpush.xpose.msra.mxu0 0.0
    %459 = vmatpush.xpose.msra.mxu0 %v442
    %460 = vmatmul.f32.gmra.mxu0 %v45
    %v461 = vpop.f32.mrf.mxu0
    %v462 = vadd.f32 0.0, %v461
    %463 = vmatmul.f32.gmra.mxu0 %v48
    %v464 = vpop.f32.mrf.mxu0
    %v465 = vadd.f32 0.0, %v464
    %466 = vmatmul.f32.gmra.mxu0 %v51
    %v467 = vpop.f32.mrf.mxu0
    %v468 = vadd.f32 0.0, %v467
    %469 = vmatmul.f32.gmra.mxu0 %v54
    %v470 = vpop.f32.mrf.mxu0
    %v471 = vadd.f32 0.0, %v470
    %472 = vdwg.mxu0
    %v474 = vsel %vm43, %v42, 0
    %476 = vmatpush.xpose.msra.mxu0 0.0
    %477 = vmatpush.xpose.msra.mxu0 0.0
    %478 = vmatpush.xpose.msra.mxu0 0.0
    %479 = vmatpush.xpose.msra.mxu0 0.0
    %480 = vmatpush.xpose.msra.mxu0 0.0
    %481 = vmatpush.xpose.msra.mxu0 0.0
    %482 = vmatpush.xpose.msra.mxu0 0.0
    %483 = vmatpush.xpose.msra.mxu0 0.0
    %484 = vmatpush.xpose.msra.mxu0 0.0
    %485 = vmatpush.xpose.msra.mxu0 0.0
    %486 = vmatpush.xpose.msra.mxu0 0.0
    %487 = vmatpush.xpose.msra.mxu0 0.0
    %488 = vmatpush.xpose.msra.mxu0 0.0
    %489 = vmatpush.xpose.msra.mxu0 0.0
    %490 = vmatpush.xpose.msra.mxu0 0.0
    %491 = vmatpush.xpose.msra.mxu0 %v474
    %492 = vmatmul.f32.gmra.mxu0 %v45
    %v493 = vpop.f32.mrf.mxu0
    %v494 = vadd.f32 0.0, %v493
    %495 = vmatmul.f32.gmra.mxu0 %v48
    %v496 = vpop.f32.mrf.mxu0
    %v497 = vadd.f32 0.0, %v496
    %498 = vmatmul.f32.gmra.mxu0 %v51
    %v499 = vpop.f32.mrf.mxu0
    %v500 = vadd.f32 0.0, %v499
    %501 = vmatmul.f32.gmra.mxu0 %v54
    %v502 = vpop.f32.mrf.mxu0
    %v503 = vadd.f32 0.0, %v502
    %504 = vdwg.mxu0
    %s505 = scalar_lea.vmem %s2, 256
    %v506 = vld [vmem:[%s505] sm:$0xff]
    %v507 = vld [vmem:[%s505 + $0x8] sm:$0xff]
    %v508 = vld [vmem:[%s505 + $0x10] sm:$0xff]
    %v509 = vld [vmem:[%s505 + $0x18] sm:$0xff]
    %v510 = vld [vmem:[%s505 + $0x20] sm:$0xff]
    %v511 = vld [vmem:[%s505 + $0x28] sm:$0xff]
    %v512 = vld [vmem:[%s505 + $0x30] sm:$0xff]
    %v513 = vld [vmem:[%s505 + $0x38] sm:$0xff]
    %v514 = vld [vmem:[%s505 + $0x40] sm:$0xff]
    %v515 = vld [vmem:[%s505 + $0x48] sm:$0xff]
    %v516 = vld [vmem:[%s505 + $0x50] sm:$0xff]
    %v517 = vld [vmem:[%s505 + $0x58] sm:$0xff]
    %v518 = vld [vmem:[%s505 + $0x60] sm:$0xff]
    %v519 = vld [vmem:[%s505 + $0x68] sm:$0xff]
    %v520 = vld [vmem:[%s505 + $0x70] sm:$0xff]
    %v521 = vld [vmem:[%s505 + $0x78] sm:$0xff]
    %v522 = vadd.f32 %v398, %v506
    %v523 = vadd.f32 %v401, %v507
    %v524 = vadd.f32 %v404, %v508
    %v525 = vadd.f32 %v407, %v509
    %v526 = vadd.f32 %v430, %v510
    %v527 = vadd.f32 %v433, %v511
    %v528 = vadd.f32 %v436, %v512
    %v529 = vadd.f32 %v439, %v513
    %v530 = vadd.f32 %v462, %v514
    %v531 = vadd.f32 %v465, %v515
    %v532 = vadd.f32 %v468, %v516
    %v533 = vadd.f32 %v471, %v517
    %v534 = vadd.f32 %v494, %v518
    %v535 = vadd.f32 %v497, %v519
    %v536 = vadd.f32 %v500, %v520
    %v537 = vadd.f32 %v503, %v521
    %v538 = vlaneseq
    %v539 = vand.u32 %v538, 127
    %vm540 = vcmp.ge.s32.totalorder %v539, 0
    %vm541 = vcmp.lt.s32.totalorder %v539, 4
    %vm542 = vmand %vm540, %vm541
    %v543 = vsel %vm542, 0.25, 0.0
    %v544 = vmul.f32 %v200, %v543
    %v545 = vmul.f32 %v201, %v543
    %v546 = vmul.f32 %v202, %v543
    %v547 = vmul.f32 %v203, %v543
    %v548 = vmul.f32 %v204, %v543
    %v549 = vmul.f32 %v205, %v543
    %v550 = vmul.f32 %v206, %v543
    %v551 = vmul.f32 %v207, %v543
    %v552 = vmul.f32 %v208, %v543
    %v553 = vmul.f32 %v209, %v543
    %v554 = vmul.f32 %v210, %v543
    %v555 = vmul.f32 %v211, %v543
    %v556 = vmul.f32 %v212, %v543
    %v557 = vmul.f32 %v213, %v543
    %v558 = vmul.f32 %v214, %v543
    %v559 = vmul.f32 %v215, %v543
    %vm560 = vcmp.ge.s32.totalorder %v539, 4
    %vm561 = vcmp.lt.s32.totalorder %v539, 8
    %vm562 = vmand %vm560, %vm561
    %v563 = vsel %vm562, 0.25, 0.0
    %v564 = vmul.f32 %v200, %v563
    %v565 = vmul.f32 %v201, %v563
    %v566 = vmul.f32 %v202, %v563
    %v567 = vmul.f32 %v203, %v563
    %v568 = vmul.f32 %v204, %v563
    %v569 = vmul.f32 %v205, %v563
    %v570 = vmul.f32 %v206, %v563
    %v571 = vmul.f32 %v207, %v563
    %v572 = vmul.f32 %v208, %v563
    %v573 = vmul.f32 %v209, %v563
    %v574 = vmul.f32 %v210, %v563
    %v575 = vmul.f32 %v211, %v563
    %v576 = vmul.f32 %v212, %v563
    %v577 = vmul.f32 %v213, %v563
    %v578 = vmul.f32 %v214, %v563
    %v579 = vmul.f32 %v215, %v563
    %vm580 = vcmask 64512
    %v582 = vsel %vm580, %v564, 0
    %v585 = vsel %vm580, %v565, 0
    %v588 = vsel %vm580, %v566, 0
    %v591 = vsel %vm580, %v567, 0
    %v594 = vsel %vm580, %v568, 0
    %v597 = vsel %vm580, %v569, 0
    %v600 = vsel %vm580, %v570, 0
    %v603 = vsel %vm580, %v571, 0
    %v606 = vsel %vm580, %v572, 0
    %v609 = vsel %vm580, %v573, 0
    %v612 = vsel %vm580, %v574, 0
    %v615 = vsel %vm580, %v575, 0
    %v618 = vsel %vm580, %v576, 0
    %v621 = vsel %vm580, %v577, 0
    %v624 = vsel %vm580, %v578, 0
    %v627 = vsel %vm580, %v579, 0
    %v630 = vsel %vm580, %v361, 0
    %v633 = vsel %vm580, %v362, 0
    %v636 = vsel %vm580, %v363, 0
    %v639 = vsel %vm580, %v364, 0
    %v642 = vsel %vm580, %v365, 0
    %v645 = vsel %vm580, %v366, 0
    %v648 = vsel %vm580, %v367, 0
    %v651 = vsel %vm580, %v368, 0
    %v654 = vsel %vm580, %v369, 0
    %v657 = vsel %vm580, %v370, 0
    %v660 = vsel %vm580, %v371, 0
    %v663 = vsel %vm580, %v372, 0
    %v666 = vsel %vm580, %v373, 0
    %v669 = vsel %vm580, %v374, 0
    %v672 = vsel %vm580, %v375, 0
    %v675 = vsel %vm580, %v376, 0
    %677 = vmatpush.xpose.msra.mxu0 %v675
    %678 = vmatpush.xpose.msra.mxu0 %v672
    %679 = vmatpush.xpose.msra.mxu0 %v669
    %680 = vmatpush.xpose.msra.mxu0 %v666
    %681 = vmatpush.xpose.msra.mxu0 %v663
    %682 = vmatpush.xpose.msra.mxu0 %v660
    %683 = vmatpush.xpose.msra.mxu0 %v657
    %684 = vmatpush.xpose.msra.mxu0 %v654
    %685 = vmatpush.xpose.msra.mxu0 %v651
    %686 = vmatpush.xpose.msra.mxu0 %v648
    %687 = vmatpush.xpose.msra.mxu0 %v645
    %688 = vmatpush.xpose.msra.mxu0 %v642
    %689 = vmatpush.xpose.msra.mxu0 %v639
    %690 = vmatpush.xpose.msra.mxu0 %v636
    %691 = vmatpush.xpose.msra.mxu0 %v633
    %692 = vmatpush.xpose.msra.mxu0 %v630
    %693 = vmatmul.f32.gmra.mxu0 %v582
    %v694 = vpop.f32.mrf.mxu0
    %v695 = vadd.f32 0.0, %v694
    %696 = vmatmul.f32.gmra.mxu0 %v585
    %v697 = vpop.f32.mrf.mxu0
    %v698 = vadd.f32 0.0, %v697
    %699 = vmatmul.f32.gmra.mxu0 %v588
    %v700 = vpop.f32.mrf.mxu0
    %v701 = vadd.f32 0.0, %v700
    %702 = vmatmul.f32.gmra.mxu0 %v591
    %v703 = vpop.f32.mrf.mxu0
    %v704 = vadd.f32 0.0, %v703
    %705 = vmatmul.f32.gmra.mxu0 %v594
    %v706 = vpop.f32.mrf.mxu0
    %v707 = vadd.f32 0.0, %v706
    %708 = vmatmul.f32.gmra.mxu0 %v597
    %v709 = vpop.f32.mrf.mxu0
    %v710 = vadd.f32 0.0, %v709
    %711 = vmatmul.f32.gmra.mxu0 %v600
    %v712 = vpop.f32.mrf.mxu0
    %v713 = vadd.f32 0.0, %v712
    %714 = vmatmul.f32.gmra.mxu0 %v603
    %v715 = vpop.f32.mrf.mxu0
    %v716 = vadd.f32 0.0, %v715
    %717 = vmatmul.f32.gmra.mxu0 %v606
    %v718 = vpop.f32.mrf.mxu0
    %v719 = vadd.f32 0.0, %v718
    %720 = vmatmul.f32.gmra.mxu0 %v609
    %v721 = vpop.f32.mrf.mxu0
    %v722 = vadd.f32 0.0, %v721
    %723 = vmatmul.f32.gmra.mxu0 %v612
    %v724 = vpop.f32.mrf.mxu0
    %v725 = vadd.f32 0.0, %v724
    %726 = vmatmul.f32.gmra.mxu0 %v615
    %v727 = vpop.f32.mrf.mxu0
    %v728 = vadd.f32 0.0, %v727
    %729 = vmatmul.f32.gmra.mxu0 %v618
    %v730 = vpop.f32.mrf.mxu0
    %v731 = vadd.f32 0.0, %v730
    %732 = vmatmul.f32.gmra.mxu0 %v621
    %v733 = vpop.f32.mrf.mxu0
    %v734 = vadd.f32 0.0, %v733
    %735 = vmatmul.f32.gmra.mxu0 %v624
    %v736 = vpop.f32.mrf.mxu0
    %v737 = vadd.f32 0.0, %v736
    %738 = vmatmul.f32.gmra.mxu0 %v627
    %v739 = vpop.f32.mrf.mxu0
    %v740 = vadd.f32 0.0, %v739
    %741 = vdwg.mxu0
    %v742 = vld [vmem:[%s6] sm:$0xff]
    %v743 = vld [vmem:[%s6 + $0x8] sm:$0xff]
    %v744 = vld [vmem:[%s6 + $0x10] sm:$0xff]
    %v745 = vld [vmem:[%s6 + $0x18] sm:$0xff]
    %v746 = vld [vmem:[%s6 + $0x20] sm:$0xff]
    %v747 = vld [vmem:[%s6 + $0x28] sm:$0xff]
    %v748 = vld [vmem:[%s6 + $0x30] sm:$0xff]
    %v749 = vld [vmem:[%s6 + $0x38] sm:$0xff]
    %v750 = vld [vmem:[%s6 + $0x40] sm:$0xff]
    %v751 = vld [vmem:[%s6 + $0x48] sm:$0xff]
    %v752 = vld [vmem:[%s6 + $0x50] sm:$0xff]
    %v753 = vld [vmem:[%s6 + $0x58] sm:$0xff]
    %v754 = vld [vmem:[%s6 + $0x60] sm:$0xff]
    %v755 = vld [vmem:[%s6 + $0x68] sm:$0xff]
    %v756 = vld [vmem:[%s6 + $0x70] sm:$0xff]
    %v757 = vld [vmem:[%s6 + $0x78] sm:$0xff]
    %v758 = vmul.f32 %v742, %v695
    %v759 = vmul.f32 %v743, %v698
    %v760 = vmul.f32 %v744, %v701
    %v761 = vmul.f32 %v745, %v704
    %v762 = vmul.f32 %v746, %v707
    %v763 = vmul.f32 %v747, %v710
    %v764 = vmul.f32 %v748, %v713
    %v765 = vmul.f32 %v749, %v716
    %v766 = vmul.f32 %v750, %v719
    %v767 = vmul.f32 %v751, %v722
    %v768 = vmul.f32 %v752, %v725
    %v769 = vmul.f32 %v753, %v728
    %v770 = vmul.f32 %v754, %v731
    %v771 = vmul.f32 %v755, %v734
    %v772 = vmul.f32 %v756, %v737
    %v773 = vmul.f32 %v757, %v740
    %v775 = vsel %vm580, %v544, 0
    %v778 = vsel %vm580, %v545, 0
    %v781 = vsel %vm580, %v546, 0
    %v784 = vsel %vm580, %v547, 0
    %v787 = vsel %vm580, %v548, 0
    %v790 = vsel %vm580, %v549, 0
    %v793 = vsel %vm580, %v550, 0
    %v796 = vsel %vm580, %v551, 0
    %v799 = vsel %vm580, %v552, 0
    %v802 = vsel %vm580, %v553, 0
    %v805 = vsel %vm580, %v554, 0
    %v808 = vsel %vm580, %v555, 0
    %v811 = vsel %vm580, %v556, 0
    %v814 = vsel %vm580, %v557, 0
    %v817 = vsel %vm580, %v558, 0
    %v820 = vsel %vm580, %v559, 0
    %822 = vmatpush.xpose.msra.mxu0 %v675
    %823 = vmatpush.xpose.msra.mxu0 %v672
    %824 = vmatpush.xpose.msra.mxu0 %v669
    %825 = vmatpush.xpose.msra.mxu0 %v666
    %826 = vmatpush.xpose.msra.mxu0 %v663
    %827 = vmatpush.xpose.msra.mxu0 %v660
    %828 = vmatpush.xpose.msra.mxu0 %v657
    %829 = vmatpush.xpose.msra.mxu0 %v654
    %830 = vmatpush.xpose.msra.mxu0 %v651
    %831 = vmatpush.xpose.msra.mxu0 %v648
    %832 = vmatpush.xpose.msra.mxu0 %v645
    %833 = vmatpush.xpose.msra.mxu0 %v642
    %834 = vmatpush.xpose.msra.mxu0 %v639
    %835 = vmatpush.xpose.msra.mxu0 %v636
    %836 = vmatpush.xpose.msra.mxu0 %v633
    %837 = vmatpush.xpose.msra.mxu0 %v630
    %838 = vmatmul.f32.gmra.mxu0 %v775
    %v839 = vpop.f32.mrf.mxu0
    %v840 = vadd.f32 %v758, %v839
    %841 = vmatmul.f32.gmra.mxu0 %v778
    %v842 = vpop.f32.mrf.mxu0
    %v843 = vadd.f32 %v759, %v842
    %844 = vmatmul.f32.gmra.mxu0 %v781
    %v845 = vpop.f32.mrf.mxu0
    %v846 = vadd.f32 %v760, %v845
    %847 = vmatmul.f32.gmra.mxu0 %v784
    %v848 = vpop.f32.mrf.mxu0
    %v849 = vadd.f32 %v761, %v848
    %850 = vmatmul.f32.gmra.mxu0 %v787
    %v851 = vpop.f32.mrf.mxu0
    %v852 = vadd.f32 %v762, %v851
    %853 = vmatmul.f32.gmra.mxu0 %v790
    %v854 = vpop.f32.mrf.mxu0
    %v855 = vadd.f32 %v763, %v854
    %856 = vmatmul.f32.gmra.mxu0 %v793
    %v857 = vpop.f32.mrf.mxu0
    %v858 = vadd.f32 %v764, %v857
    %859 = vmatmul.f32.gmra.mxu0 %v796
    %v860 = vpop.f32.mrf.mxu0
    %v861 = vadd.f32 %v765, %v860
    %862 = vmatmul.f32.gmra.mxu0 %v799
    %v863 = vpop.f32.mrf.mxu0
    %v864 = vadd.f32 %v766, %v863
    %865 = vmatmul.f32.gmra.mxu0 %v802
    %v866 = vpop.f32.mrf.mxu0
    %v867 = vadd.f32 %v767, %v866
    %868 = vmatmul.f32.gmra.mxu0 %v805
    %v869 = vpop.f32.mrf.mxu0
    %v870 = vadd.f32 %v768, %v869
    %871 = vmatmul.f32.gmra.mxu0 %v808
    %v872 = vpop.f32.mrf.mxu0
    %v873 = vadd.f32 %v769, %v872
    %874 = vmatmul.f32.gmra.mxu0 %v811
    %v875 = vpop.f32.mrf.mxu0
    %v876 = vadd.f32 %v770, %v875
    %877 = vmatmul.f32.gmra.mxu0 %v814
    %v878 = vpop.f32.mrf.mxu0
    %v879 = vadd.f32 %v771, %v878
    %880 = vmatmul.f32.gmra.mxu0 %v817
    %v881 = vpop.f32.mrf.mxu0
    %v882 = vadd.f32 %v772, %v881
    %883 = vmatmul.f32.gmra.mxu0 %v820
    %v884 = vpop.f32.mrf.mxu0
    %v885 = vadd.f32 %v773, %v884
    %886 = vdwg.mxu0
    %v887 = vld [vmem:[%s5] sm:$0xff]
    %v888 = vld [vmem:[%s5 + $0x8] sm:$0xff]
    %v889 = vld [vmem:[%s5 + $0x10] sm:$0xff]
    %v890 = vld [vmem:[%s5 + $0x18] sm:$0xff]
    %v891 = vld [vmem:[%s5 + $0x20] sm:$0xff]
    %v892 = vld [vmem:[%s5 + $0x28] sm:$0xff]
    %v893 = vld [vmem:[%s5 + $0x30] sm:$0xff]
    %v894 = vld [vmem:[%s5 + $0x38] sm:$0xff]
    %v895 = vld [vmem:[%s5 + $0x40] sm:$0xff]
    %v896 = vld [vmem:[%s5 + $0x48] sm:$0xff]
    %v897 = vld [vmem:[%s5 + $0x50] sm:$0xff]
    %v898 = vld [vmem:[%s5 + $0x58] sm:$0xff]
    %v899 = vld [vmem:[%s5 + $0x60] sm:$0xff]
    %v900 = vld [vmem:[%s5 + $0x68] sm:$0xff]
    %v901 = vld [vmem:[%s5 + $0x70] sm:$0xff]
    %v902 = vld [vmem:[%s5 + $0x78] sm:$0xff]
    %v903 = vadd.f32 %v840, %v887
    %v904 = vadd.f32 %v843, %v888
    %v905 = vadd.f32 %v846, %v889
    %v906 = vadd.f32 %v849, %v890
    %v907 = vadd.f32 %v852, %v891
    %v908 = vadd.f32 %v855, %v892
    %v909 = vadd.f32 %v858, %v893
    %v910 = vadd.f32 %v861, %v894
    %v911 = vadd.f32 %v864, %v895
    %v912 = vadd.f32 %v867, %v896
    %v913 = vadd.f32 %v870, %v897
    %v914 = vadd.f32 %v873, %v898
    %v915 = vadd.f32 %v876, %v899
    %v916 = vadd.f32 %v879, %v900
    %v917 = vadd.f32 %v882, %v901
    %v918 = vadd.f32 %v885, %v902
    %919 = vmax.xlane.f32.xlu0 %v903
    %v920 = vpop.xlane.xlu0 %919
    %921 = vmax.xlane.f32.xlu0 %v904
    %v922 = vpop.xlane.xlu0 %921
    %923 = vmax.xlane.f32.xlu0 %v905
    %v924 = vpop.xlane.xlu0 %923
    %925 = vmax.xlane.f32.xlu0 %v906
    %v926 = vpop.xlane.xlu0 %925
    %927 = vmax.xlane.f32.xlu0 %v907
    %v928 = vpop.xlane.xlu0 %927
    %929 = vmax.xlane.f32.xlu0 %v908
    %v930 = vpop.xlane.xlu0 %929
    %931 = vmax.xlane.f32.xlu0 %v909
    %v932 = vpop.xlane.xlu0 %931
    %933 = vmax.xlane.f32.xlu0 %v910
    %v934 = vpop.xlane.xlu0 %933
    %935 = vmax.xlane.f32.xlu0 %v911
    %v936 = vpop.xlane.xlu0 %935
    %937 = vmax.xlane.f32.xlu0 %v912
    %v938 = vpop.xlane.xlu0 %937
    %939 = vmax.xlane.f32.xlu0 %v913
    %v940 = vpop.xlane.xlu0 %939
    %941 = vmax.xlane.f32.xlu0 %v914
    %v942 = vpop.xlane.xlu0 %941
    %943 = vmax.xlane.f32.xlu0 %v915
    %v944 = vpop.xlane.xlu0 %943
    %945 = vmax.xlane.f32.xlu0 %v916
    %v946 = vpop.xlane.xlu0 %945
    %947 = vmax.xlane.f32.xlu0 %v917
    %v948 = vpop.xlane.xlu0 %947
    %949 = vmax.xlane.f32.xlu0 %v918
    %v950 = vpop.xlane.xlu0 %949
    %v951 = vsub.f32 %v903, %v920
    %v952 = vsub.f32 %v904, %v922
    %v953 = vsub.f32 %v905, %v924
    %v954 = vsub.f32 %v906, %v926
    %v955 = vsub.f32 %v907, %v928
    %v956 = vsub.f32 %v908, %v930
    %v957 = vsub.f32 %v909, %v932
    %v958 = vsub.f32 %v910, %v934
    %v959 = vsub.f32 %v911, %v936
    %v960 = vsub.f32 %v912, %v938
    %v961 = vsub.f32 %v913, %v940
    %v962 = vsub.f32 %v914, %v942
    %v963 = vsub.f32 %v915, %v944
    %v964 = vsub.f32 %v916, %v946
    %v965 = vsub.f32 %v917, %v948
    %v966 = vsub.f32 %v918, %v950
    %v967 = vmul.f32 %v951, 1.442695
    %v968 = vpow.pop %v967
    %v969 = vmul.f32 %v952, 1.442695
    %v970 = vpow.pop %v969
    %v971 = vmul.f32 %v953, 1.442695
    %v972 = vpow.pop %v971
    %v973 = vmul.f32 %v954, 1.442695
    %v974 = vpow.pop %v973
    %v975 = vmul.f32 %v955, 1.442695
    %v976 = vpow.pop %v975
    %v977 = vmul.f32 %v956, 1.442695
    %v978 = vpow.pop %v977
    %v979 = vmul.f32 %v957, 1.442695
    %v980 = vpow.pop %v979
    %v981 = vmul.f32 %v958, 1.442695
    %v982 = vpow.pop %v981
    %v983 = vmul.f32 %v959, 1.442695
    %v984 = vpow.pop %v983
    %v985 = vmul.f32 %v960, 1.442695
    %v986 = vpow.pop %v985
    %v987 = vmul.f32 %v961, 1.442695
    %v988 = vpow.pop %v987
    %v989 = vmul.f32 %v962, 1.442695
    %v990 = vpow.pop %v989
    %v991 = vmul.f32 %v963, 1.442695
    %v992 = vpow.pop %v991
    %v993 = vmul.f32 %v964, 1.442695
    %v994 = vpow.pop %v993
    %v995 = vmul.f32 %v965, 1.442695
    %v996 = vpow.pop %v995
    %v997 = vmul.f32 %v966, 1.442695
    %v998 = vpow.pop %v997
    %999 = vadd.xlane.f32.xlu0 %v968
    %v1000 = vpop.xlane.xlu0 %999
    %1001 = vadd.xlane.f32.xlu0 %v970
    %v1002 = vpop.xlane.xlu0 %1001
    %1003 = vadd.xlane.f32.xlu0 %v972
    %v1004 = vpop.xlane.xlu0 %1003
    %1005 = vadd.xlane.f32.xlu0 %v974
    %v1006 = vpop.xlane.xlu0 %1005
    %1007 = vadd.xlane.f32.xlu0 %v976
    %v1008 = vpop.xlane.xlu0 %1007
    %1009 = vadd.xlane.f32.xlu0 %v978
    %v1010 = vpop.xlane.xlu0 %1009
    %1011 = vadd.xlane.f32.xlu0 %v980
    %v1012 = vpop.xlane.xlu0 %1011
    %1013 = vadd.xlane.f32.xlu0 %v982
    %v1014 = vpop.xlane.xlu0 %1013
    %1015 = vadd.xlane.f32.xlu0 %v984
    %v1016 = vpop.xlane.xlu0 %1015
    %1017 = vadd.xlane.f32.xlu0 %v986
    %v1018 = vpop.xlane.xlu0 %1017
    %1019 = vadd.xlane.f32.xlu0 %v988
    %v1020 = vpop.xlane.xlu0 %1019
    %1021 = vadd.xlane.f32.xlu0 %v990
    %v1022 = vpop.xlane.xlu0 %1021
    %1023 = vadd.xlane.f32.xlu0 %v992
    %v1024 = vpop.xlane.xlu0 %1023
    %1025 = vadd.xlane.f32.xlu0 %v994
    %v1026 = vpop.xlane.xlu0 %1025
    %1027 = vadd.xlane.f32.xlu0 %v996
    %v1028 = vpop.xlane.xlu0 %1027
    %1029 = vadd.xlane.f32.xlu0 %v998
    %v1030 = vpop.xlane.xlu0 %1029
    %1031 = vmatpush.msra.mxu0 %v537
    %1032 = vmatpush.msra.mxu0 %v536
    %1033 = vmatpush.msra.mxu0 %v535
    %1034 = vmatpush.msra.mxu0 %v534
    %1035 = vmatpush.msra.mxu0 %v533
    %1036 = vmatpush.msra.mxu0 %v532
    %1037 = vmatpush.msra.mxu0 %v531
    %1038 = vmatpush.msra.mxu0 %v530
    %1039 = vmatpush.msra.mxu0 %v529
    %1040 = vmatpush.msra.mxu0 %v528
    %1041 = vmatpush.msra.mxu0 %v527
    %1042 = vmatpush.msra.mxu0 %v526
    %1043 = vmatpush.msra.mxu0 %v525
    %1044 = vmatpush.msra.mxu0 %v524
    %1045 = vmatpush.msra.mxu0 %v523
    %1046 = vmatpush.msra.mxu0 %v522
    %1047 = vmatmul.f32.gmra.mxu0 %v968
    %v1048 = vpop.f32.mrf.mxu0
    %v1049 = vadd.f32 0.0, %v1048
    %1050 = vmatmul.f32.gmra.mxu0 %v970
    %v1051 = vpop.f32.mrf.mxu0
    %v1052 = vadd.f32 0.0, %v1051
    %1053 = vmatmul.f32.gmra.mxu0 %v972
    %v1054 = vpop.f32.mrf.mxu0
    %v1055 = vadd.f32 0.0, %v1054
    %1056 = vmatmul.f32.gmra.mxu0 %v974
    %v1057 = vpop.f32.mrf.mxu0
    %v1058 = vadd.f32 0.0, %v1057
    %1059 = vmatmul.f32.gmra.mxu0 %v976
    %v1060 = vpop.f32.mrf.mxu0
    %v1061 = vadd.f32 0.0, %v1060
    %1062 = vmatmul.f32.gmra.mxu0 %v978
    %v1063 = vpop.f32.mrf.mxu0
    %v1064 = vadd.f32 0.0, %v1063
    %1065 = vmatmul.f32.gmra.mxu0 %v980
    %v1066 = vpop.f32.mrf.mxu0
    %v1067 = vadd.f32 0.0, %v1066
    %1068 = vmatmul.f32.gmra.mxu0 %v982
    %v1069 = vpop.f32.mrf.mxu0
    %v1070 = vadd.f32 0.0, %v1069
    %1071 = vmatmul.f32.gmra.mxu0 %v984
    %v1072 = vpop.f32.mrf.mxu0
    %v1073 = vadd.f32 0.0, %v1072
    %1074 = vmatmul.f32.gmra.mxu0 %v986
    %v1075 = vpop.f32.mrf.mxu0
    %v1076 = vadd.f32 0.0, %v1075
    %1077 = vmatmul.f32.gmra.mxu0 %v988
    %v1078 = vpop.f32.mrf.mxu0
    %v1079 = vadd.f32 0.0, %v1078
    %1080 = vmatmul.f32.gmra.mxu0 %v990
    %v1081 = vpop.f32.mrf.mxu0
    %v1082 = vadd.f32 0.0, %v1081
    %1083 = vmatmul.f32.gmra.mxu0 %v992
    %v1084 = vpop.f32.mrf.mxu0
    %v1085 = vadd.f32 0.0, %v1084
    %1086 = vmatmul.f32.gmra.mxu0 %v994
    %v1087 = vpop.f32.mrf.mxu0
    %v1088 = vadd.f32 0.0, %v1087
    %1089 = vmatmul.f32.gmra.mxu0 %v996
    %v1090 = vpop.f32.mrf.mxu0
    %v1091 = vadd.f32 0.0, %v1090
    %1092 = vmatmul.f32.gmra.mxu0 %v998
    %v1093 = vpop.f32.mrf.mxu0
    %v1094 = vadd.f32 0.0, %v1093
    %1095 = vdwg.mxu0
    %v1096 = vrcp.pop %v1000
    %v1097 = vmul.f32 %v1000, %v1096
    %v1098 = vsub.f32 1.0, %v1097
    %v1099 = vmul.f32 %v1096, %v1098
    %v1100 = vadd.f32 %v1096, %v1099
    %vm1101 = vweird.f32 %v1000
    %vm1102 = vweird.f32 %v1096
    %vm1103 = vmor %vm1101, %vm1102
    %v1104 = vsel %vm1103, %v1096, %v1100
    %v1105 = vand.u32 2147483647, %v1000
    %vm1106 = vcmp.eq.f32.partialorder %v1105, 8.507059e+37
    %v1107 = vand.u32 %v1000, 2147483648
    %v1108 = vor.u32 1.1754944e-38, %v1107
    %v1109 = vsel %vm1106, %v1108, %v1104
    %v1110 = vmul.f32 1.0, %v1109
    %v1111 = vrcp.pop %v1002
    %v1112 = vmul.f32 %v1002, %v1111
    %v1113 = vsub.f32 1.0, %v1112
    %v1114 = vmul.f32 %v1111, %v1113
    %v1115 = vadd.f32 %v1111, %v1114
    %vm1116 = vweird.f32 %v1002
    %vm1117 = vweird.f32 %v1111
    %vm1118 = vmor %vm1116, %vm1117
    %v1119 = vsel %vm1118, %v1111, %v1115
    %v1120 = vand.u32 2147483647, %v1002
    %vm1121 = vcmp.eq.f32.partialorder %v1120, 8.507059e+37
    %v1122 = vand.u32 %v1002, 2147483648
    %v1123 = vor.u32 1.1754944e-38, %v1122
    %v1124 = vsel %vm1121, %v1123, %v1119
    %v1125 = vmul.f32 1.0, %v1124
    %v1126 = vrcp.pop %v1004
    %v1127 = vmul.f32 %v1004, %v1126
    %v1128 = vsub.f32 1.0, %v1127
    %v1129 = vmul.f32 %v1126, %v1128
    %v1130 = vadd.f32 %v1126, %v1129
    %vm1131 = vweird.f32 %v1004
    %vm1132 = vweird.f32 %v1126
    %vm1133 = vmor %vm1131, %vm1132
    %v1134 = vsel %vm1133, %v1126, %v1130
    %v1135 = vand.u32 2147483647, %v1004
    %vm1136 = vcmp.eq.f32.partialorder %v1135, 8.507059e+37
    %v1137 = vand.u32 %v1004, 2147483648
    %v1138 = vor.u32 1.1754944e-38, %v1137
    %v1139 = vsel %vm1136, %v1138, %v1134
    %v1140 = vmul.f32 1.0, %v1139
    %v1141 = vrcp.pop %v1006
    %v1142 = vmul.f32 %v1006, %v1141
    %v1143 = vsub.f32 1.0, %v1142
    %v1144 = vmul.f32 %v1141, %v1143
    %v1145 = vadd.f32 %v1141, %v1144
    %vm1146 = vweird.f32 %v1006
    %vm1147 = vweird.f32 %v1141
    %vm1148 = vmor %vm1146, %vm1147
    %v1149 = vsel %vm1148, %v1141, %v1145
    %v1150 = vand.u32 2147483647, %v1006
    %vm1151 = vcmp.eq.f32.partialorder %v1150, 8.507059e+37
    %v1152 = vand.u32 %v1006, 2147483648
    %v1153 = vor.u32 1.1754944e-38, %v1152
    %v1154 = vsel %vm1151, %v1153, %v1149
    %v1155 = vmul.f32 1.0, %v1154
    %v1156 = vrcp.pop %v1008
    %v1157 = vmul.f32 %v1008, %v1156
    %v1158 = vsub.f32 1.0, %v1157
    %v1159 = vmul.f32 %v1156, %v1158
    %v1160 = vadd.f32 %v1156, %v1159
    %vm1161 = vweird.f32 %v1008
    %vm1162 = vweird.f32 %v1156
    %vm1163 = vmor %vm1161, %vm1162
    %v1164 = vsel %vm1163, %v1156, %v1160
    %v1165 = vand.u32 2147483647, %v1008
    %vm1166 = vcmp.eq.f32.partialorder %v1165, 8.507059e+37
    %v1167 = vand.u32 %v1008, 2147483648
    %v1168 = vor.u32 1.1754944e-38, %v1167
    %v1169 = vsel %vm1166, %v1168, %v1164
    %v1170 = vmul.f32 1.0, %v1169
    %v1171 = vrcp.pop %v1010
    %v1172 = vmul.f32 %v1010, %v1171
    %v1173 = vsub.f32 1.0, %v1172
    %v1174 = vmul.f32 %v1171, %v1173
    %v1175 = vadd.f32 %v1171, %v1174
    %vm1176 = vweird.f32 %v1010
    %vm1177 = vweird.f32 %v1171
    %vm1178 = vmor %vm1176, %vm1177
    %v1179 = vsel %vm1178, %v1171, %v1175
    %v1180 = vand.u32 2147483647, %v1010
    %vm1181 = vcmp.eq.f32.partialorder %v1180, 8.507059e+37
    %v1182 = vand.u32 %v1010, 2147483648
    %v1183 = vor.u32 1.1754944e-38, %v1182
    %v1184 = vsel %vm1181, %v1183, %v1179
    %v1185 = vmul.f32 1.0, %v1184
    %v1186 = vrcp.pop %v1012
    %v1187 = vmul.f32 %v1012, %v1186
    %v1188 = vsub.f32 1.0, %v1187
    %v1189 = vmul.f32 %v1186, %v1188
    %v1190 = vadd.f32 %v1186, %v1189
    %vm1191 = vweird.f32 %v1012
    %vm1192 = vweird.f32 %v1186
    %vm1193 = vmor %vm1191, %vm1192
    %v1194 = vsel %vm1193, %v1186, %v1190
    %v1195 = vand.u32 2147483647, %v1012
    %vm1196 = vcmp.eq.f32.partialorder %v1195, 8.507059e+37
    %v1197 = vand.u32 %v1012, 2147483648
    %v1198 = vor.u32 1.1754944e-38, %v1197
    %v1199 = vsel %vm1196, %v1198, %v1194
    %v1200 = vmul.f32 1.0, %v1199
    %v1201 = vrcp.pop %v1014
    %v1202 = vmul.f32 %v1014, %v1201
    %v1203 = vsub.f32 1.0, %v1202
    %v1204 = vmul.f32 %v1201, %v1203
    %v1205 = vadd.f32 %v1201, %v1204
    %vm1206 = vweird.f32 %v1014
    %vm1207 = vweird.f32 %v1201
    %vm1208 = vmor %vm1206, %vm1207
    %v1209 = vsel %vm1208, %v1201, %v1205
    %v1210 = vand.u32 2147483647, %v1014
    %vm1211 = vcmp.eq.f32.partialorder %v1210, 8.507059e+37
    %v1212 = vand.u32 %v1014, 2147483648
    %v1213 = vor.u32 1.1754944e-38, %v1212
    %v1214 = vsel %vm1211, %v1213, %v1209
    %v1215 = vmul.f32 1.0, %v1214
    %v1216 = vrcp.pop %v1016
    %v1217 = vmul.f32 %v1016, %v1216
    %v1218 = vsub.f32 1.0, %v1217
    %v1219 = vmul.f32 %v1216, %v1218
    %v1220 = vadd.f32 %v1216, %v1219
    %vm1221 = vweird.f32 %v1016
    %vm1222 = vweird.f32 %v1216
    %vm1223 = vmor %vm1221, %vm1222
    %v1224 = vsel %vm1223, %v1216, %v1220
    %v1225 = vand.u32 2147483647, %v1016
    %vm1226 = vcmp.eq.f32.partialorder %v1225, 8.507059e+37
    %v1227 = vand.u32 %v1016, 2147483648
    %v1228 = vor.u32 1.1754944e-38, %v1227
    %v1229 = vsel %vm1226, %v1228, %v1224
    %v1230 = vmul.f32 1.0, %v1229
    %v1231 = vrcp.pop %v1018
    %v1232 = vmul.f32 %v1018, %v1231
    %v1233 = vsub.f32 1.0, %v1232
    %v1234 = vmul.f32 %v1231, %v1233
    %v1235 = vadd.f32 %v1231, %v1234
    %vm1236 = vweird.f32 %v1018
    %vm1237 = vweird.f32 %v1231
    %vm1238 = vmor %vm1236, %vm1237
    %v1239 = vsel %vm1238, %v1231, %v1235
    %v1240 = vand.u32 2147483647, %v1018
    %vm1241 = vcmp.eq.f32.partialorder %v1240, 8.507059e+37
    %v1242 = vand.u32 %v1018, 2147483648
    %v1243 = vor.u32 1.1754944e-38, %v1242
    %v1244 = vsel %vm1241, %v1243, %v1239
    %v1245 = vmul.f32 1.0, %v1244
    %v1246 = vrcp.pop %v1020
    %v1247 = vmul.f32 %v1020, %v1246
    %v1248 = vsub.f32 1.0, %v1247
    %v1249 = vmul.f32 %v1246, %v1248
    %v1250 = vadd.f32 %v1246, %v1249
    %vm1251 = vweird.f32 %v1020
    %vm1252 = vweird.f32 %v1246
    %vm1253 = vmor %vm1251, %vm1252
    %v1254 = vsel %vm1253, %v1246, %v1250
    %v1255 = vand.u32 2147483647, %v1020
    %vm1256 = vcmp.eq.f32.partialorder %v1255, 8.507059e+37
    %v1257 = vand.u32 %v1020, 2147483648
    %v1258 = vor.u32 1.1754944e-38, %v1257
    %v1259 = vsel %vm1256, %v1258, %v1254
    %v1260 = vmul.f32 1.0, %v1259
    %v1261 = vrcp.pop %v1022
    %v1262 = vmul.f32 %v1022, %v1261
    %v1263 = vsub.f32 1.0, %v1262
    %v1264 = vmul.f32 %v1261, %v1263
    %v1265 = vadd.f32 %v1261, %v1264
    %vm1266 = vweird.f32 %v1022
    %vm1267 = vweird.f32 %v1261
    %vm1268 = vmor %vm1266, %vm1267
    %v1269 = vsel %vm1268, %v1261, %v1265
    %v1270 = vand.u32 2147483647, %v1022
    %vm1271 = vcmp.eq.f32.partialorder %v1270, 8.507059e+37
    %v1272 = vand.u32 %v1022, 2147483648
    %v1273 = vor.u32 1.1754944e-38, %v1272
    %v1274 = vsel %vm1271, %v1273, %v1269
    %v1275 = vmul.f32 1.0, %v1274
    %v1276 = vrcp.pop %v1024
    %v1277 = vmul.f32 %v1024, %v1276
    %v1278 = vsub.f32 1.0, %v1277
    %v1279 = vmul.f32 %v1276, %v1278
    %v1280 = vadd.f32 %v1276, %v1279
    %vm1281 = vweird.f32 %v1024
    %vm1282 = vweird.f32 %v1276
    %vm1283 = vmor %vm1281, %vm1282
    %v1284 = vsel %vm1283, %v1276, %v1280
    %v1285 = vand.u32 2147483647, %v1024
    %vm1286 = vcmp.eq.f32.partialorder %v1285, 8.507059e+37
    %v1287 = vand.u32 %v1024, 2147483648
    %v1288 = vor.u32 1.1754944e-38, %v1287
    %v1289 = vsel %vm1286, %v1288, %v1284
    %v1290 = vmul.f32 1.0, %v1289
    %v1291 = vrcp.pop %v1026
    %v1292 = vmul.f32 %v1026, %v1291
    %v1293 = vsub.f32 1.0, %v1292
    %v1294 = vmul.f32 %v1291, %v1293
    %v1295 = vadd.f32 %v1291, %v1294
    %vm1296 = vweird.f32 %v1026
    %vm1297 = vweird.f32 %v1291
    %vm1298 = vmor %vm1296, %vm1297
    %v1299 = vsel %vm1298, %v1291, %v1295
    %v1300 = vand.u32 2147483647, %v1026
    %vm1301 = vcmp.eq.f32.partialorder %v1300, 8.507059e+37
    %v1302 = vand.u32 %v1026, 2147483648
    %v1303 = vor.u32 1.1754944e-38, %v1302
    %v1304 = vsel %vm1301, %v1303, %v1299
    %v1305 = vmul.f32 1.0, %v1304
    %v1306 = vrcp.pop %v1028
    %v1307 = vmul.f32 %v1028, %v1306
    %v1308 = vsub.f32 1.0, %v1307
    %v1309 = vmul.f32 %v1306, %v1308
    %v1310 = vadd.f32 %v1306, %v1309
    %vm1311 = vweird.f32 %v1028
    %vm1312 = vweird.f32 %v1306
    %vm1313 = vmor %vm1311, %vm1312
    %v1314 = vsel %vm1313, %v1306, %v1310
    %v1315 = vand.u32 2147483647, %v1028
    %vm1316 = vcmp.eq.f32.partialorder %v1315, 8.507059e+37
    %v1317 = vand.u32 %v1028, 2147483648
    %v1318 = vor.u32 1.1754944e-38, %v1317
    %v1319 = vsel %vm1316, %v1318, %v1314
    %v1320 = vmul.f32 1.0, %v1319
    %v1321 = vrcp.pop %v1030
    %v1322 = vmul.f32 %v1030, %v1321
    %v1323 = vsub.f32 1.0, %v1322
    %v1324 = vmul.f32 %v1321, %v1323
    %v1325 = vadd.f32 %v1321, %v1324
    %vm1326 = vweird.f32 %v1030
    %vm1327 = vweird.f32 %v1321
    %vm1328 = vmor %vm1326, %vm1327
    %v1329 = vsel %vm1328, %v1321, %v1325
    %v1330 = vand.u32 2147483647, %v1030
    %vm1331 = vcmp.eq.f32.partialorder %v1330, 8.507059e+37
    %v1332 = vand.u32 %v1030, 2147483648
    %v1333 = vor.u32 1.1754944e-38, %v1332
    %v1334 = vsel %vm1331, %v1333, %v1329
    %v1335 = vmul.f32 1.0, %v1334
    %v1336 = vmul.f32 %v1049, %v1110
    %v1337 = vmul.f32 %v1052, %v1125
    %v1338 = vmul.f32 %v1055, %v1140
    %v1339 = vmul.f32 %v1058, %v1155
    %v1340 = vmul.f32 %v1061, %v1170
    %v1341 = vmul.f32 %v1064, %v1185
    %v1342 = vmul.f32 %v1067, %v1200
    %v1343 = vmul.f32 %v1070, %v1215
    %v1344 = vmul.f32 %v1073, %v1230
    %v1345 = vmul.f32 %v1076, %v1245
    %v1346 = vmul.f32 %v1079, %v1260
    %v1347 = vmul.f32 %v1082, %v1275
    %v1348 = vmul.f32 %v1085, %v1290
    %v1349 = vmul.f32 %v1088, %v1305
    %v1350 = vmul.f32 %v1091, %v1320
    %v1351 = vmul.f32 %v1094, %v1335
    %v1352 = vld [vmem:[%s3] sm:$0xff]
    %v1353 = vld [vmem:[%s3 + $0x8] sm:$0xff]
    %v1354 = vld [vmem:[%s3 + $0x10] sm:$0xff]
    %v1355 = vld [vmem:[%s3 + $0x18] sm:$0xff]
    %v1357 = vsel %vm580, %v1340, 0
    %v1360 = vsel %vm580, %v1341, 0
    %v1363 = vsel %vm580, %v1342, 0
    %v1366 = vsel %vm580, %v1343, 0
    %1368 = vmatpush.msra.mxu0 0.0
    %1369 = vmatpush.msra.mxu0 0.0
    %1370 = vmatpush.msra.mxu0 0.0
    %1371 = vmatpush.msra.mxu0 0.0
    %1372 = vmatpush.msra.mxu0 0.0
    %1373 = vmatpush.msra.mxu0 0.0
    %1374 = vmatpush.msra.mxu0 0.0
    %1375 = vmatpush.msra.mxu0 0.0
    %1376 = vmatpush.msra.mxu0 0.0
    %1377 = vmatpush.msra.mxu0 0.0
    %1378 = vmatpush.msra.mxu0 0.0
    %1379 = vmatpush.msra.mxu0 0.0
    %1380 = vmatpush.msra.mxu0 0.0
    %1381 = vmatpush.msra.mxu0 0.0
    %1382 = vmatpush.msra.mxu0 0.0
    %1383 = vmatpush.msra.mxu0 %v1353
    %1384 = vmatmul.f32.gmra.mxu0 %v1357
    %v1385 = vpop.f32.mrf.mxu0
    %v1386 = vadd.f32 0.0, %v1385
    %1387 = vmatmul.f32.gmra.mxu0 %v1360
    %v1388 = vpop.f32.mrf.mxu0
    %v1389 = vadd.f32 0.0, %v1388
    %1390 = vmatmul.f32.gmra.mxu0 %v1363
    %v1391 = vpop.f32.mrf.mxu0
    %v1392 = vadd.f32 0.0, %v1391
    %1393 = vmatmul.f32.gmra.mxu0 %v1366
    %v1394 = vpop.f32.mrf.mxu0
    %v1395 = vadd.f32 0.0, %v1394
    %1396 = vdwg.mxu0
    %v1398 = vsel %vm580, %v1336, 0
    %v1401 = vsel %vm580, %v1337, 0
    %v1404 = vsel %vm580, %v1338, 0
    %v1407 = vsel %vm580, %v1339, 0
    %1409 = vmatpush.msra.mxu0 0.0
    %1410 = vmatpush.msra.mxu0 0.0
    %1411 = vmatpush.msra.mxu0 0.0
    %1412 = vmatpush.msra.mxu0 0.0
    %1413 = vmatpush.msra.mxu0 0.0
    %1414 = vmatpush.msra.mxu0 0.0
    %1415 = vmatpush.msra.mxu0 0.0
    %1416 = vmatpush.msra.mxu0 0.0
    %1417 = vmatpush.msra.mxu0 0.0
    %1418 = vmatpush.msra.mxu0 0.0
    %1419 = vmatpush.msra.mxu0 0.0
    %1420 = vmatpush.msra.mxu0 0.0
    %1421 = vmatpush.msra.mxu0 0.0
    %1422 = vmatpush.msra.mxu0 0.0
    %1423 = vmatpush.msra.mxu0 0.0
    %1424 = vmatpush.msra.mxu0 %v1352
    %1425 = vmatmul.f32.gmra.mxu0 %v1398
    %v1426 = vpop.f32.mrf.mxu0
    %v1427 = vadd.f32 %v1386, %v1426
    %1428 = vmatmul.f32.gmra.mxu0 %v1401
    %v1429 = vpop.f32.mrf.mxu0
    %v1430 = vadd.f32 %v1389, %v1429
    %1431 = vmatmul.f32.gmra.mxu0 %v1404
    %v1432 = vpop.f32.mrf.mxu0
    %v1433 = vadd.f32 %v1392, %v1432
    %1434 = vmatmul.f32.gmra.mxu0 %v1407
    %v1435 = vpop.f32.mrf.mxu0
    %v1436 = vadd.f32 %v1395, %v1435
    %1437 = vdwg.mxu0
    %v1439 = vsel %vm580, %v1344, 0
    %v1442 = vsel %vm580, %v1345, 0
    %v1445 = vsel %vm580, %v1346, 0
    %v1448 = vsel %vm580, %v1347, 0
    %1450 = vmatpush.msra.mxu0 0.0
    %1451 = vmatpush.msra.mxu0 0.0
    %1452 = vmatpush.msra.mxu0 0.0
    %1453 = vmatpush.msra.mxu0 0.0
    %1454 = vmatpush.msra.mxu0 0.0
    %1455 = vmatpush.msra.mxu0 0.0
    %1456 = vmatpush.msra.mxu0 0.0
    %1457 = vmatpush.msra.mxu0 0.0
    %1458 = vmatpush.msra.mxu0 0.0
    %1459 = vmatpush.msra.mxu0 0.0
    %1460 = vmatpush.msra.mxu0 0.0
    %1461 = vmatpush.msra.mxu0 0.0
    %1462 = vmatpush.msra.mxu0 0.0
    %1463 = vmatpush.msra.mxu0 0.0
    %1464 = vmatpush.msra.mxu0 0.0
    %1465 = vmatpush.msra.mxu0 %v1354
    %1466 = vmatmul.f32.gmra.mxu0 %v1439
    %v1467 = vpop.f32.mrf.mxu0
    %v1468 = vadd.f32 0.0, %v1467
    %1469 = vmatmul.f32.gmra.mxu0 %v1442
    %v1470 = vpop.f32.mrf.mxu0
    %v1471 = vadd.f32 0.0, %v1470
    %1472 = vmatmul.f32.gmra.mxu0 %v1445
    %v1473 = vpop.f32.mrf.mxu0
    %v1474 = vadd.f32 0.0, %v1473
    %1475 = vmatmul.f32.gmra.mxu0 %v1448
    %v1476 = vpop.f32.mrf.mxu0
    %v1477 = vadd.f32 0.0, %v1476
    %1478 = vdwg.mxu0
    %v1479 = vadd.f32 %v1427, %v1468
    %v1480 = vadd.f32 %v1430, %v1471
    %v1481 = vadd.f32 %v1433, %v1474
    %v1482 = vadd.f32 %v1436, %v1477
    %v1484 = vsel %vm580, %v1348, 0
    %v1487 = vsel %vm580, %v1349, 0
    %v1490 = vsel %vm580, %v1350, 0
    %v1493 = vsel %vm580, %v1351, 0
    %1495 = vmatpush.msra.mxu0 0.0
    %1496 = vmatpush.msra.mxu0 0.0
    %1497 = vmatpush.msra.mxu0 0.0
    %1498 = vmatpush.msra.mxu0 0.0
    %1499 = vmatpush.msra.mxu0 0.0
    %1500 = vmatpush.msra.mxu0 0.0
    %1501 = vmatpush.msra.mxu0 0.0
    %1502 = vmatpush.msra.mxu0 0.0
    %1503 = vmatpush.msra.mxu0 0.0
    %1504 = vmatpush.msra.mxu0 0.0
    %1505 = vmatpush.msra.mxu0 0.0
    %1506 = vmatpush.msra.mxu0 0.0
    %1507 = vmatpush.msra.mxu0 0.0
    %1508 = vmatpush.msra.mxu0 0.0
    %1509 = vmatpush.msra.mxu0 0.0
    %1510 = vmatpush.msra.mxu0 %v1355
    %1511 = vmatmul.f32.gmra.mxu0 %v1484
    %v1512 = vpop.f32.mrf.mxu0
    %v1513 = vadd.f32 0.0, %v1512
    %1514 = vmatmul.f32.gmra.mxu0 %v1487
    %v1515 = vpop.f32.mrf.mxu0
    %v1516 = vadd.f32 0.0, %v1515
    %1517 = vmatmul.f32.gmra.mxu0 %v1490
    %v1518 = vpop.f32.mrf.mxu0
    %v1519 = vadd.f32 0.0, %v1518
    %1520 = vmatmul.f32.gmra.mxu0 %v1493
    %v1521 = vpop.f32.mrf.mxu0
    %v1522 = vadd.f32 0.0, %v1521
    %1523 = vdwg.mxu0
    %v1524 = vadd.f32 %v1479, %v1513
    %v1525 = vadd.f32 %v1480, %v1516
    %v1526 = vadd.f32 %v1481, %v1519
    %v1527 = vadd.f32 %v1482, %v1522
    %v1528 = vld [vmem:[%s4] sm:$0x1]
    %v1530 = vperm.slane %v1528, 0
    %v1532 = vadd.f32 %v1524, %v1530
    %v1533 = vadd.f32 %v1525, %v1530
    %v1534 = vadd.f32 %v1526, %v1530
    %v1535 = vadd.f32 %v1527, %v1530
    %1536 = vst.msk [vmem:[#allocation2] sm:$0xff] %vm43, %v1532
    %1537 = vst.msk [vmem:[#allocation2 + $0x8] sm:$0xff] %vm43, %v1533
    %1538 = vst.msk [vmem:[#allocation2 + $0x10] sm:$0xff] %vm43, %v1534
    %1539 = vst.msk [vmem:[#allocation2 + $0x18] sm:$0xff] %vm43, %v1535
    // Predicated region
    $region30: #{tpu_custom_call.1} parent=1 // pred_check
      _
    $region31: #{tpu_custom_call.1} parent=1 // pred_check_branch
      %1541 = sbr.rel (0) target = $region33
    $region32: #{tpu_custom_call.1} parent=1 // pred_region
      %1543 = vsyncadd [#allocation3], 0
      %s1544 = sshll.u32 [#allocation2], 4
      %s1545 = int_to_ptr.vmem [resolvable:$true] %s1544
      %s1546 = sshll.u32 %s7, 4
      %s1547 = int_to_ptr.hbm [resolvable:$true] %s1546
      %1552 = dma.vmem_to_hbm [thread:$0]  %s1545, 512, %s1547, [#allocation3], 128, 128, 8
    $region33: #{tpu_custom_call.1} parent=1 // pred_fallthru
      _
    // Predicated region
    $region34: #{tpu_custom_call.1} parent=1 // pred_check
      _
    $region35: #{tpu_custom_call.1} parent=1 // pred_check_branch
      %1554 = sbr.rel (0) target = $region37
    $region36: #{tpu_custom_call.1} parent=1 // pred_region
      %1556 = dma.done [#allocation3], 512
    $region37: #{tpu_custom_call.1} parent=1 // pred_fallthru
      _
    %1557 = vsyncpa [#allocation3], 1

</llo_original>
